<compile_context>
chip_gen: v7x
topology: tpu7x:2x2x1
jax: 0.10.0
libtpu: 0.0.40
codegen_flags: <defaults>
</compile_context>

<pallas_src>
import math
import functools

import jax
import jax.numpy as jnp
from jax.experimental import pallas as pl
from jax.experimental.pallas import tpu as pltpu


def _mha_layer_kernel(x_ref, wqkv_ref, bqkv_ref, wo_ref, bo_ref, wc_ref, bc_ref,
                      o_ref, attn_ref, *, n_head):
    """One grid step == one batch element.  Everything fits in VMEM."""
    x = x_ref[0]                              # (T, E)
    T, E = x.shape
    D = E // n_head

    # Fused QKV projection: one wide MXU pass over x (N = 3E).
    # Wq / bq were pre-scaled by 1/sqrt(D) at parameter-preparation time.
    qkv = jnp.dot(x, wqkv_ref[...], preferred_element_type=jnp.float32) \
        + bqkv_ref[...]                        # (T, 3E)
    q = qkv[:, :E]                             # already scaled
    k = qkv[:, E:2 * E]
    v = qkv[:, 2 * E:]

    # Additive float mask built in-kernel (== tril(ones(T, T))): cheap VPU work
    # instead of a T*T f32 DMA + resident VMEM buffer.
    row = jax.lax.broadcasted_iota(jnp.int32, (T, T), 0)
    col = jax.lax.broadcasted_iota(jnp.int32, (T, T), 1)
    add_mask = (row >= col).astype(jnp.float32)

    # Static unroll over heads (n_head is small).  Each head's output is
    # written straight into its VMEM scratch column slice -> no concatenate,
    # no H simultaneous live head outputs.
    # TODO(synk): switch to lax.fori_loop if n_head grows large.
    for h in range(n_head):
        qh = q[:, h * D:(h + 1) * D]           # (T, D), pre-scaled
        kh = k[:, h * D:(h + 1) * D]           # (T, D)
        vh = v[:, h * D:(h + 1) * D]           # (T, D)

        # q @ k^T without materializing a transpose: MXU consumes K^T natively.
        s = jax.lax.dot_general(qh, kh, (((1,), (1,)), ((), ())),
                                preferred_element_type=jnp.float32)
        s = s + add_mask                        # additive float mask (quirk!)

        m = jnp.max(s, axis=-1, keepdims=True)
        p = jnp.exp(s - m)
        l = jnp.sum(p, axis=-1, keepdims=True)

        oh = jnp.dot(p, vh, preferred_element_type=jnp.float32)   # (T, D)
        # Deferred softmax normalization: scale the (T, D) output, not the
        # (T, T) probs.  (approx=True reciprocal is available if the accuracy
        # budget allows; exact kept here for the tight f32 reference check.)
        attn_ref[:, h * D:(h + 1) * D] = oh * pl.reciprocal(l, approx=False)

    # out_proj of nn.MultiheadAttention, then c_proj Linear.
    y = jnp.dot(attn_ref[...], wo_ref[...],
                preferred_element_type=jnp.float32) + bo_ref[...]
    z = jnp.dot(y, wc_ref[...],
                preferred_element_type=jnp.float32) + bc_ref[...]

    o_ref[0] = z.astype(o_ref.dtype)


def multihead_attention_layer(x, kparams, n_head):
    """x: (B, T, E) float32. kparams: dict from prepare_params()."""
    B, T, E = x.shape
    assert E % n_head == 0

    kernel = functools.partial(_mha_layer_kernel, n_head=n_head)

    def const(shape):
        # Weight/bias blocks are invariant across the batch grid.
        return pl.BlockSpec(shape, lambda b: (0, 0))

    return pl.pallas_call(
        kernel,
        out_shape=jax.ShapeDtypeStruct((B, T, E), x.dtype),
        grid_spec=pltpu.PrefetchScalarGridSpec(
            num_scalar_prefetch=0,
            grid=(B,),
            in_specs=[
                pl.BlockSpec((1, T, E), lambda b: (b, 0, 0)),  # x
                const((E, 3 * E)),   # fused [Wq*scale | Wk | Wv]^T
                const((1, 3 * E)),   # fused [bq*scale | bk | bv]
                const((E, E)),       # out_proj.weight^T
                const((1, E)),       # out_proj.bias
                const((E, E)),       # c_proj.weight^T
                const((1, E)),       # c_proj.bias
            ],
            out_specs=pl.BlockSpec((1, T, E), lambda b: (b, 0, 0)),
            scratch_shapes=[pltpu.VMEM((T, E), jnp.float32)],   # attn accum
        ),
        compiler_params=pltpu.CompilerParams(
            dimension_semantics=("parallel",)),
    )(x,
      kparams["wqkv_t"], kparams["bqkv"],
      kparams["wo_t"], kparams["bo"],
      kparams["wc_t"], kparams["bc"])


def prepare_params(params, n_head):
    """One-time static transform of module parameters for the kernel:
    fold 1/sqrt(D) into Wq/bq and fuse QKV (order q|k|v matches torch's
    in_proj split — must be preserved)."""
    E = params["wq_t"].shape[0]
    D = E // n_head
    scale = 1.0 / math.sqrt(D)
    wqkv_t = jnp.concatenate(
        [params["wq_t"] * scale, params["wk_t"], params["wv_t"]], axis=1)
    bqkv = jnp.concatenate(
        [params["bq"] * scale, params["bk"], params["bv"]], axis=1)
    return {
        "wqkv_t": wqkv_t, "bqkv": bqkv,
        "wo_t": params["wo_t"], "bo": params["bo"],
        "wc_t": params["wc_t"], "bc": params["bc"],
    }


def _reference(x, params, n_head):
    """Pure-JAX reference matching the PyTorch forward (eval mode)."""
    B, T, E = x.shape
    D = E // n_head
    q = x @ params["wq_t"] + params["bq"]
    k = x @ params["wk_t"] + params["bk"]
    v = x @ params["wv_t"] + params["bv"]

    def split(t):
        return t.reshape(B, T, n_head, D).transpose(0, 2, 1, 3)  # (B,H,T,D)

    qh, kh, vh = split(q), split(k), split(v)
    s = jnp.einsum("bhtd,bhsd->bhts", qh, kh) / math.sqrt(D)
    s = s + jnp.tril(jnp.ones((T, T), jnp.float32))[None, None]  # float mask
    p = jax.nn.softmax(s, axis=-1)
    o = jnp.einsum("bhts,bhsd->bhtd", p, vh)
    o = o.transpose(0, 2, 1, 3).reshape(B, T, E)
    y = o @ params["wo_t"] + params["bo"]
    return y @ params["wc_t"] + params["bc"]


def init_params(key, n_embd):
    """Deterministic synthetic weights with the module's __init__ shapes."""
    keys = jax.random.split(key, 10)
    E = n_embd
    s = 0.1
    return {
        # in_proj (3E, E) split into q/k/v, stored transposed (E, E)
        "wq_t": jax.random.normal(keys[0], (E, E), jnp.float32) * s,
        "wk_t": jax.random.normal(keys[1], (E, E), jnp.float32) * s,
        "wv_t": jax.random.normal(keys[2], (E, E), jnp.float32) * s,
        "bq": jax.random.normal(keys[3], (1, E), jnp.float32) * s,
        "bk": jax.random.normal(keys[4], (1, E), jnp.float32) * s,
        "bv": jax.random.normal(keys[5], (1, E), jnp.float32) * s,
        # MultiheadAttention.out_proj (E, E) stored transposed
        "wo_t": jax.random.normal(keys[6], (E, E), jnp.float32) * s,
        "bo": jax.random.normal(keys[7], (1, E), jnp.float32) * s,
        # c_proj Linear (E, E) stored transposed
        "wc_t": jax.random.normal(keys[8], (E, E), jnp.float32) * s,
        "bc": jax.random.normal(keys[9], (1, E), jnp.float32) * s,
    }


if __name__ == "__main__":
    # Small config consistent with the module; E=128 keeps the output tile
    # lane-dense (128 lanes) and D=32 per head.
    B, T, E, H = 2, 8, 128, 4
    key = jax.random.PRNGKey(0)
    kx, kp = jax.random.split(key)

    x = jax.random.normal(kx, (B, T, E), jnp.float32)
    params = init_params(kp, n_embd=E)
    kparams = prepare_params(params, n_head=H)   # one-time static transform

    out = multihead_attention_layer(x, kparams, n_head=H)
    out = jax.block_until_ready(out)

    ref = _reference(x, params, n_head=H)
    assert out.shape == (B, T, E)
    assert jnp.allclose(out, ref, atol=1e-4, rtol=1e-4), "mismatch vs reference"

    print("KERNEL_OK")
</pallas_src>

<mosaic_0001>
module attributes {stable_mosaic.version = 11 : i64} {
  func.func @_mha_layer_kernel(%arg0: i32, %arg1: memref<1x8x128xf32, #tpu.memory_space<vmem>>, %arg2: memref<128x384xf32, #tpu.memory_space<vmem>>, %arg3: memref<1x384xf32, #tpu.memory_space<vmem>>, %arg4: memref<128x128xf32, #tpu.memory_space<vmem>>, %arg5: memref<1x128xf32, #tpu.memory_space<vmem>>, %arg6: memref<128x128xf32, #tpu.memory_space<vmem>>, %arg7: memref<1x128xf32, #tpu.memory_space<vmem>>, %arg8: memref<1x8x128xf32, #tpu.memory_space<vmem>>, %arg9: memref<8x128xf32, #tpu.memory_space<vmem>>) attributes {dimension_semantics = [#tpu.dimension_semantics<parallel>], iteration_bounds = array<i64: 2>, scalar_prefetch = 0 : i64, scratch_operands = 1 : i64, tpu.core_type = #tpu.core_type<tc>, window_params = [{transform_indices = @transform_0, window_bounds = array<i64: 1, 8, 128>}, {pipeline_mode = #tpu.pipeline_mode<synchronous>, transform_indices = @transform_1, window_bounds = array<i64: 128, 384>}, {pipeline_mode = #tpu.pipeline_mode<synchronous>, transform_indices = @transform_2, window_bounds = array<i64: 1, 384>}, {pipeline_mode = #tpu.pipeline_mode<synchronous>, transform_indices = @transform_3, window_bounds = array<i64: 128, 128>}, {pipeline_mode = #tpu.pipeline_mode<synchronous>, transform_indices = @transform_4, window_bounds = array<i64: 1, 128>}, {pipeline_mode = #tpu.pipeline_mode<synchronous>, transform_indices = @transform_5, window_bounds = array<i64: 128, 128>}, {pipeline_mode = #tpu.pipeline_mode<synchronous>, transform_indices = @transform_6, window_bounds = array<i64: 1, 128>}, {transform_indices = @transform_7, window_bounds = array<i64: 1, 8, 128>}]} {
    %c0 = arith.constant 0 : index
    %c0_0 = arith.constant 0 : index
    %c0_1 = arith.constant 0 : index
    %0 = vector.load %arg1[%c0, %c0_0, %c0_1] : memref<1x8x128xf32, #tpu.memory_space<vmem>>, vector<1x8x128xf32>
    %1 = vector.shape_cast %0 : vector<1x8x128xf32> to vector<8x128xf32>
    %c0_2 = arith.constant 0 : index
    %c0_3 = arith.constant 0 : index
    %2 = vector.load %arg2[%c0_2, %c0_3] : memref<128x384xf32, #tpu.memory_space<vmem>>, vector<128x384xf32>
    %cst = arith.constant dense<0.000000e+00> : vector<8x384xf32>
    %3 = tpu.matmul %1, %2, %cst {dimension_numbers = #tpu.dot_dimension_numbers<[1], [0], [0], [1], [0, 0, 1, 1], [], []>} : vector<8x128xf32>, vector<128x384xf32>, vector<8x384xf32> -> vector<8x384xf32>
    %c0_4 = arith.constant 0 : index
    %c0_5 = arith.constant 0 : index
    %4 = vector.load %arg3[%c0_4, %c0_5] : memref<1x384xf32, #tpu.memory_space<vmem>>, vector<1x384xf32>
    %5 = vector.broadcast %4 : vector<1x384xf32> to vector<8x384xf32>
    %6 = arith.addf %3, %5 : vector<8x384xf32>
    %7 = vector.extract_strided_slice %6 {offsets = [0, 0], sizes = [8, 128], strides = [1, 1]} : vector<8x384xf32> to vector<8x128xf32>
    %8 = vector.extract_strided_slice %6 {offsets = [0, 128], sizes = [8, 128], strides = [1, 1]} : vector<8x384xf32> to vector<8x128xf32>
    %9 = vector.extract_strided_slice %6 {offsets = [0, 256], sizes = [8, 128], strides = [1, 1]} : vector<8x384xf32> to vector<8x128xf32>
    %10 = tpu.iota {dimensions = array<i32: 0>} : vector<8x8xi32>
    %11 = tpu.iota {dimensions = array<i32: 1>} : vector<8x8xi32>
    %12 = arith.cmpi sge, %10, %11 : vector<8x8xi32>
    %13 = arith.extui %12 : vector<8x8xi1> to vector<8x8xi32>
    %14 = arith.sitofp %13 : vector<8x8xi32> to vector<8x8xf32>
    %15 = vector.extract_strided_slice %7 {offsets = [0, 0], sizes = [8, 32], strides = [1, 1]} : vector<8x128xf32> to vector<8x32xf32>
    %16 = vector.extract_strided_slice %8 {offsets = [0, 0], sizes = [8, 32], strides = [1, 1]} : vector<8x128xf32> to vector<8x32xf32>
    %17 = vector.extract_strided_slice %9 {offsets = [0, 0], sizes = [8, 32], strides = [1, 1]} : vector<8x128xf32> to vector<8x32xf32>
    %cst_6 = arith.constant dense<0.000000e+00> : vector<8x8xf32>
    %18 = tpu.matmul %15, %16, %cst_6 {dimension_numbers = #tpu.dot_dimension_numbers<[1], [1], [0], [0], [0, 0, 1, 0], [], []>} : vector<8x32xf32>, vector<8x32xf32>, vector<8x8xf32> -> vector<8x8xf32>
    %19 = arith.addf %18, %14 : vector<8x8xf32>
    %cst_7 = arith.constant dense<0xFF800000> : vector<8xf32>
    %20 = vector.multi_reduction <maximumf>, %19, %cst_7 [1] : vector<8x8xf32> to vector<8xf32>
    %21 = vector.shape_cast %20 : vector<8xf32> to vector<8x1xf32>
    %22 = vector.broadcast %21 : vector<8x1xf32> to vector<8x8xf32>
    %23 = arith.subf %19, %22 : vector<8x8xf32>
    %24 = math.exp %23 : vector<8x8xf32>
    %cst_8 = arith.constant dense<0.000000e+00> : vector<8xf32>
    %25 = vector.multi_reduction <add>, %24, %cst_8 [1] : vector<8x8xf32> to vector<8xf32>
    %26 = vector.shape_cast %25 : vector<8xf32> to vector<8x1xf32>
    %cst_9 = arith.constant dense<0.000000e+00> : vector<8x32xf32>
    %27 = tpu.matmul %24, %17, %cst_9 {dimension_numbers = #tpu.dot_dimension_numbers<[1], [0], [0], [1], [0, 0, 1, 1], [], []>} : vector<8x8xf32>, vector<8x32xf32>, vector<8x32xf32> -> vector<8x32xf32>
    %28 = tpu.reciprocal %26 : vector<8x1xf32> -> vector<8x1xf32>
    %29 = vector.broadcast %28 : vector<8x1xf32> to vector<8x32xf32>
    %30 = arith.mulf %27, %29 : vector<8x32xf32>
    %c0_10 = arith.constant 0 : index
    %c0_11 = arith.constant 0 : index
    %31 = vector.load %arg9[%c0_10, %c0_11] : memref<8x128xf32, #tpu.memory_space<vmem>>, vector<8x32xf32>
    tpu.vector_store %arg9[%c0_10, %c0_11], %30 {strides = array<i32>} : memref<8x128xf32, #tpu.memory_space<vmem>>, vector<8x32xf32>,
    %32 = vector.extract_strided_slice %7 {offsets = [0, 32], sizes = [8, 32], strides = [1, 1]} : vector<8x128xf32> to vector<8x32xf32>
    %33 = vector.extract_strided_slice %8 {offsets = [0, 32], sizes = [8, 32], strides = [1, 1]} : vector<8x128xf32> to vector<8x32xf32>
    %34 = vector.extract_strided_slice %9 {offsets = [0, 32], sizes = [8, 32], strides = [1, 1]} : vector<8x128xf32> to vector<8x32xf32>
    %cst_12 = arith.constant dense<0.000000e+00> : vector<8x8xf32>
    %35 = tpu.matmul %32, %33, %cst_12 {dimension_numbers = #tpu.dot_dimension_numbers<[1], [1], [0], [0], [0, 0, 1, 0], [], []>} : vector<8x32xf32>, vector<8x32xf32>, vector<8x8xf32> -> vector<8x8xf32>
    %36 = arith.addf %35, %14 : vector<8x8xf32>
    %cst_13 = arith.constant dense<0xFF800000> : vector<8xf32>
    %37 = vector.multi_reduction <maximumf>, %36, %cst_13 [1] : vector<8x8xf32> to vector<8xf32>
    %38 = vector.shape_cast %37 : vector<8xf32> to vector<8x1xf32>
    %39 = vector.broadcast %38 : vector<8x1xf32> to vector<8x8xf32>
    %40 = arith.subf %36, %39 : vector<8x8xf32>
    %41 = math.exp %40 : vector<8x8xf32>
    %cst_14 = arith.constant dense<0.000000e+00> : vector<8xf32>
    %42 = vector.multi_reduction <add>, %41, %cst_14 [1] : vector<8x8xf32> to vector<8xf32>
    %43 = vector.shape_cast %42 : vector<8xf32> to vector<8x1xf32>
    %cst_15 = arith.constant dense<0.000000e+00> : vector<8x32xf32>
    %44 = tpu.matmul %41, %34, %cst_15 {dimension_numbers = #tpu.dot_dimension_numbers<[1], [0], [0], [1], [0, 0, 1, 1], [], []>} : vector<8x8xf32>, vector<8x32xf32>, vector<8x32xf32> -> vector<8x32xf32>
    %45 = tpu.reciprocal %43 : vector<8x1xf32> -> vector<8x1xf32>
    %46 = vector.broadcast %45 : vector<8x1xf32> to vector<8x32xf32>
    %47 = arith.mulf %44, %46 : vector<8x32xf32>
    %c0_16 = arith.constant 0 : index
    %c32 = arith.constant 32 : index
    %48 = vector.load %arg9[%c0_16, %c32] : memref<8x128xf32, #tpu.memory_space<vmem>>, vector<8x32xf32>
    tpu.vector_store %arg9[%c0_16, %c32], %47 {strides = array<i32>} : memref<8x128xf32, #tpu.memory_space<vmem>>, vector<8x32xf32>,
    %49 = vector.extract_strided_slice %7 {offsets = [0, 64], sizes = [8, 32], strides = [1, 1]} : vector<8x128xf32> to vector<8x32xf32>
    %50 = vector.extract_strided_slice %8 {offsets = [0, 64], sizes = [8, 32], strides = [1, 1]} : vector<8x128xf32> to vector<8x32xf32>
    %51 = vector.extract_strided_slice %9 {offsets = [0, 64], sizes = [8, 32], strides = [1, 1]} : vector<8x128xf32> to vector<8x32xf32>
    %cst_17 = arith.constant dense<0.000000e+00> : vector<8x8xf32>
    %52 = tpu.matmul %49, %50, %cst_17 {dimension_numbers = #tpu.dot_dimension_numbers<[1], [1], [0], [0], [0, 0, 1, 0], [], []>} : vector<8x32xf32>, vector<8x32xf32>, vector<8x8xf32> -> vector<8x8xf32>
    %53 = arith.addf %52, %14 : vector<8x8xf32>
    %cst_18 = arith.constant dense<0xFF800000> : vector<8xf32>
    %54 = vector.multi_reduction <maximumf>, %53, %cst_18 [1] : vector<8x8xf32> to vector<8xf32>
    %55 = vector.shape_cast %54 : vector<8xf32> to vector<8x1xf32>
    %56 = vector.broadcast %55 : vector<8x1xf32> to vector<8x8xf32>
    %57 = arith.subf %53, %56 : vector<8x8xf32>
    %58 = math.exp %57 : vector<8x8xf32>
    %cst_19 = arith.constant dense<0.000000e+00> : vector<8xf32>
    %59 = vector.multi_reduction <add>, %58, %cst_19 [1] : vector<8x8xf32> to vector<8xf32>
    %60 = vector.shape_cast %59 : vector<8xf32> to vector<8x1xf32>
    %cst_20 = arith.constant dense<0.000000e+00> : vector<8x32xf32>
    %61 = tpu.matmul %58, %51, %cst_20 {dimension_numbers = #tpu.dot_dimension_numbers<[1], [0], [0], [1], [0, 0, 1, 1], [], []>} : vector<8x8xf32>, vector<8x32xf32>, vector<8x32xf32> -> vector<8x32xf32>
    %62 = tpu.reciprocal %60 : vector<8x1xf32> -> vector<8x1xf32>
    %63 = vector.broadcast %62 : vector<8x1xf32> to vector<8x32xf32>
    %64 = arith.mulf %61, %63 : vector<8x32xf32>
    %c0_21 = arith.constant 0 : index
    %c64 = arith.constant 64 : index
    %65 = vector.load %arg9[%c0_21, %c64] : memref<8x128xf32, #tpu.memory_space<vmem>>, vector<8x32xf32>
    tpu.vector_store %arg9[%c0_21, %c64], %64 {strides = array<i32>} : memref<8x128xf32, #tpu.memory_space<vmem>>, vector<8x32xf32>,
    %66 = vector.extract_strided_slice %7 {offsets = [0, 96], sizes = [8, 32], strides = [1, 1]} : vector<8x128xf32> to vector<8x32xf32>
    %67 = vector.extract_strided_slice %8 {offsets = [0, 96], sizes = [8, 32], strides = [1, 1]} : vector<8x128xf32> to vector<8x32xf32>
    %68 = vector.extract_strided_slice %9 {offsets = [0, 96], sizes = [8, 32], strides = [1, 1]} : vector<8x128xf32> to vector<8x32xf32>
    %cst_22 = arith.constant dense<0.000000e+00> : vector<8x8xf32>
    %69 = tpu.matmul %66, %67, %cst_22 {dimension_numbers = #tpu.dot_dimension_numbers<[1], [1], [0], [0], [0, 0, 1, 0], [], []>} : vector<8x32xf32>, vector<8x32xf32>, vector<8x8xf32> -> vector<8x8xf32>
    %70 = arith.addf %69, %14 : vector<8x8xf32>
    %cst_23 = arith.constant dense<0xFF800000> : vector<8xf32>
    %71 = vector.multi_reduction <maximumf>, %70, %cst_23 [1] : vector<8x8xf32> to vector<8xf32>
    %72 = vector.shape_cast %71 : vector<8xf32> to vector<8x1xf32>
    %73 = vector.broadcast %72 : vector<8x1xf32> to vector<8x8xf32>
    %74 = arith.subf %70, %73 : vector<8x8xf32>
    %75 = math.exp %74 : vector<8x8xf32>
    %cst_24 = arith.constant dense<0.000000e+00> : vector<8xf32>
    %76 = vector.multi_reduction <add>, %75, %cst_24 [1] : vector<8x8xf32> to vector<8xf32>
    %77 = vector.shape_cast %76 : vector<8xf32> to vector<8x1xf32>
    %cst_25 = arith.constant dense<0.000000e+00> : vector<8x32xf32>
    %78 = tpu.matmul %75, %68, %cst_25 {dimension_numbers = #tpu.dot_dimension_numbers<[1], [0], [0], [1], [0, 0, 1, 1], [], []>} : vector<8x8xf32>, vector<8x32xf32>, vector<8x32xf32> -> vector<8x32xf32>
    %79 = tpu.reciprocal %77 : vector<8x1xf32> -> vector<8x1xf32>
    %80 = vector.broadcast %79 : vector<8x1xf32> to vector<8x32xf32>
    %81 = arith.mulf %78, %80 : vector<8x32xf32>
    %c0_26 = arith.constant 0 : index
    %c96 = arith.constant 96 : index
    %82 = vector.load %arg9[%c0_26, %c96] : memref<8x128xf32, #tpu.memory_space<vmem>>, vector<8x32xf32>
    tpu.vector_store %arg9[%c0_26, %c96], %81 {strides = array<i32>} : memref<8x128xf32, #tpu.memory_space<vmem>>, vector<8x32xf32>,
    %c0_27 = arith.constant 0 : index
    %c0_28 = arith.constant 0 : index
    %83 = vector.load %arg9[%c0_27, %c0_28] : memref<8x128xf32, #tpu.memory_space<vmem>>, vector<8x128xf32>
    %c0_29 = arith.constant 0 : index
    %c0_30 = arith.constant 0 : index
    %84 = vector.load %arg4[%c0_29, %c0_30] : memref<128x128xf32, #tpu.memory_space<vmem>>, vector<128x128xf32>
    %cst_31 = arith.constant dense<0.000000e+00> : vector<8x128xf32>
    %85 = tpu.matmul %83, %84, %cst_31 {dimension_numbers = #tpu.dot_dimension_numbers<[1], [0], [0], [1], [0, 0, 1, 1], [], []>} : vector<8x128xf32>, vector<128x128xf32>, vector<8x128xf32> -> vector<8x128xf32>
    %c0_32 = arith.constant 0 : index
    %c0_33 = arith.constant 0 : index
    %86 = vector.load %arg5[%c0_32, %c0_33] : memref<1x128xf32, #tpu.memory_space<vmem>>, vector<1x128xf32>
    %87 = vector.broadcast %86 : vector<1x128xf32> to vector<8x128xf32>
    %88 = arith.addf %85, %87 : vector<8x128xf32>
    %c0_34 = arith.constant 0 : index
    %c0_35 = arith.constant 0 : index
    %89 = vector.load %arg6[%c0_34, %c0_35] : memref<128x128xf32, #tpu.memory_space<vmem>>, vector<128x128xf32>
    %cst_36 = arith.constant dense<0.000000e+00> : vector<8x128xf32>
    %90 = tpu.matmul %88, %89, %cst_36 {dimension_numbers = #tpu.dot_dimension_numbers<[1], [0], [0], [1], [0, 0, 1, 1], [], []>} : vector<8x128xf32>, vector<128x128xf32>, vector<8x128xf32> -> vector<8x128xf32>
    %c0_37 = arith.constant 0 : index
    %c0_38 = arith.constant 0 : index
    %91 = vector.load %arg7[%c0_37, %c0_38] : memref<1x128xf32, #tpu.memory_space<vmem>>, vector<1x128xf32>
    %92 = vector.broadcast %91 : vector<1x128xf32> to vector<8x128xf32>
    %93 = arith.addf %90, %92 : vector<8x128xf32>
    %c0_39 = arith.constant 0 : index
    %c0_40 = arith.constant 0 : index
    %c0_41 = arith.constant 0 : index
    %94 = vector.load %arg8[%c0_39, %c0_40, %c0_41] : memref<1x8x128xf32, #tpu.memory_space<vmem>>, vector<1x8x128xf32>
    %95 = vector.shape_cast %94 : vector<1x8x128xf32> to vector<8x128xf32>
    %96 = vector.shape_cast %93 : vector<8x128xf32> to vector<1x8x128xf32>
    tpu.vector_store %arg8[%c0_39, %c0_40, %c0_41], %96 {strides = array<i32>} : memref<1x8x128xf32, #tpu.memory_space<vmem>>, vector<1x8x128xf32>,
    return
  }
  func.func @transform_0(%arg0: i32) -> (i32, i32, i32) {
    %c0_i32 = arith.constant 0 : i32
    %c0_i32_0 = arith.constant 0 : i32
    %c0_i32_1 = arith.constant 0 : i32
    return %arg0, %c0_i32, %c0_i32_0 : i32, i32, i32
  }
  func.func @transform_1(%arg0: i32) -> (i32, i32) {
    %c0_i32 = arith.constant 0 : i32
    %c0_i32_0 = arith.constant 0 : i32
    %c0_i32_1 = arith.constant 0 : i32
    return %c0_i32, %c0_i32_0 : i32, i32
  }
  func.func @transform_2(%arg0: i32) -> (i32, i32) {
    %c0_i32 = arith.constant 0 : i32
    %c0_i32_0 = arith.constant 0 : i32
    %c0_i32_1 = arith.constant 0 : i32
    return %c0_i32, %c0_i32_0 : i32, i32
  }
  func.func @transform_3(%arg0: i32) -> (i32, i32) {
    %c0_i32 = arith.constant 0 : i32
    %c0_i32_0 = arith.constant 0 : i32
    %c0_i32_1 = arith.constant 0 : i32
    return %c0_i32, %c0_i32_0 : i32, i32
  }
  func.func @transform_4(%arg0: i32) -> (i32, i32) {
    %c0_i32 = arith.constant 0 : i32
    %c0_i32_0 = arith.constant 0 : i32
    %c0_i32_1 = arith.constant 0 : i32
    return %c0_i32, %c0_i32_0 : i32, i32
  }
  func.func @transform_5(%arg0: i32) -> (i32, i32) {
    %c0_i32 = arith.constant 0 : i32
    %c0_i32_0 = arith.constant 0 : i32
    %c0_i32_1 = arith.constant 0 : i32
    return %c0_i32, %c0_i32_0 : i32, i32
  }
  func.func @transform_6(%arg0: i32) -> (i32, i32) {
    %c0_i32 = arith.constant 0 : i32
    %c0_i32_0 = arith.constant 0 : i32
    %c0_i32_1 = arith.constant 0 : i32
    return %c0_i32, %c0_i32_0 : i32, i32
  }
  func.func @transform_7(%arg0: i32) -> (i32, i32, i32) {
    %c0_i32 = arith.constant 0 : i32
    %c0_i32_0 = arith.constant 0 : i32
    %c0_i32_1 = arith.constant 0 : i32
    return %arg0, %c0_i32, %c0_i32_0 : i32, i32, i32
  }
}

</mosaic_0001>

<llo_original>
// kernel: tpu_custom_call.1
$region0: #{tpu_custom_call.1}
  #allocation0 [shape = 'u32[]', space=smem, size = 0x4, offset = 0x4, fixed_abs, tag = 'smem constant byte address 0x4 - core index']
  #allocation1 [shape = 'u32[144,128]{1,0:T(1,128)}', space=vmem, size = 0x12000, scoped, tag = 'internal scratch']
  #allocation2 [shape = 'f32[8,128]{1,0:T(8,128)}', space=vmem, size = 0x1000, scoped, tag = 'scratch operand']
  %s0 = inlined_call_operand.hbm [shape: f32[2,8,128], index: 0, kind: input, shape index: {}]
  %s1 = inlined_call_operand.hbm [shape: f32[128,384], index: 1, kind: input, shape index: {}]
  %s2 = inlined_call_operand.vmem [shape: f32[1,384], index: 2, kind: input, shape index: {}]
  %s3 = inlined_call_operand.hbm [shape: f32[128,128], index: 3, kind: input, shape index: {}]
  %s4 = inlined_call_operand.vmem [shape: f32[1,128], index: 4, kind: input, shape index: {}]
  %s5 = inlined_call_operand.hbm [shape: f32[128,128], index: 5, kind: input, shape index: {}]
  %s6 = inlined_call_operand.vmem [shape: f32[1,128], index: 6, kind: input, shape index: {}]
  %s7 = inlined_call_operand.hbm [shape: f32[2,8,128], index: 7, kind: output, shape index: {}]
  %s8 = sld [smem:[#allocation0]]
  $region77: #{tpu_custom_call.1} parent=0
    _
  %s10 = ssub.s32 1, %s8
  %s11 = scalar_select 0, %s10, %s8
  $region1: #{tpu_custom_call.1} parent=0
    #allocation3 [shape = 'u8[8192]{0}', space=vmem, size = 0x2000, scoped, tag = 'input window, operand 0']
    #allocation4 [shape = 's32[2]{0}', space=sflag, size = 0x8, scoped, tag = 'scoped memory for tpu_custom_call.1']
    #allocation5 [shape = 's32[2]{0}', space=sflag, size = 0x8, scoped, tag = 'scoped memory for tpu_custom_call.1']
    #allocation6 [shape = 'u8[196608]{0}', space=vmem, size = 0x30000, scoped, tag = 'input window, operand 1, single buffered']
    #allocation7 [shape = 's32[1]{0}', space=sflag, size = 0x4, scoped, tag = 'scoped memory for tpu_custom_call.1']
    #allocation8 [shape = 'u8[65536]{0}', space=vmem, size = 0x10000, scoped, tag = 'input window, operand 3, single buffered']
    #allocation9 [shape = 'u8[65536]{0}', space=vmem, size = 0x10000, scoped, tag = 'input window, operand 5, single buffered']
    #allocation10 [shape = 's32[1]{0}', space=sflag, size = 0x4, scoped, tag = 'scoped memory for tpu_custom_call.1']
    #allocation11 [shape = 'u8[8192]{0}', space=vmem, size = 0x2000, scoped, tag = 'output window, operand 0']
    %12 = vsyncpa [#allocation4], 0
    %s13 = scalar_lea.sflag [#allocation4], 1
    %14 = vsyncpa %s13, 0
    %15 = vsyncpa [#allocation7], 0
    %16 = vsyncpa [#allocation10], 0
    %17 = vsyncpa [#allocation5], 0
    %s18 = scalar_lea.sflag [#allocation5], 1
    %19 = vsyncpa %s18, 0
    loop: start=0, step=1, limit=4
    $region2: #{tpu_custom_call.1} parent=1 // loop_pre_header
      _
    $region3: #{tpu_custom_call.1} parent=1 // loop_header
      %s21 = sphi 0, %s25
      %p22 = scmp.ge.s32.totalorder %s21, 4
      %s31 = sphi 0, %s33
      %s34 = sphi 0, %s31
      %s35 = sphi 0, %s34
      %s51 = sphi 0, %s35
      %s55 = sphi 0, %s55
      %s57 = sphi 0, %s55
      %s58 = sphi 0, %s57
      %s72 = sphi 0, %s58
      %s76 = sphi 0, %s76
      %s78 = sphi 0, %s76
      %s79 = sphi 0, %s78
      %s93 = sphi 0, %s79
      %s97 = sphi 0, %s97
      %s99 = sphi 0, %s97
      %s100 = sphi 0, %s99
      %s114 = sphi 0, %s100
      %s118 = sphi 0, %s118
      %s120 = sphi 0, %s118
      %s121 = sphi 0, %s120
      %s135 = sphi 0, %s121
      %s139 = sphi 0, %s139
      %s141 = sphi 0, %s139
      %s142 = sphi 0, %s141
      %s156 = sphi 0, %s142
      %s160 = sphi 0, %s160
      %s162 = sphi 0, %s160
      %s163 = sphi 0, %s162
      %s177 = sphi 0, %s163
      %s183 = sphi 0, %s185
      %s186 = sphi 0, %s183
      %s187 = sphi 0, %s186
      %s203 = sphi 0, %s187
    $region4: #{tpu_custom_call.1} parent=1 // loop_header_branch
      %24 = sbr.rel (%p22) target = $region8
    $region5: #{tpu_custom_call.1} parent=1 // loop_body
      %s26 = ssub.s32 %s21, 1
      %s27 = ssub.s32 %s21, 2
      %s28 = sadd.s32 %s21, 1
      %s29 = ssub.s32 %s21, %s28
      %p30 = scmp.eq.s32.totalorder %s29, 0
      %s32 = sadd.s32 %s31, 1
      %s33 = scalar_select %p30, %s31, %s32
      %p36 = pneg %p30
      %p37 = scmp.eq.s32.totalorder %s21, 1
      %p38 = por %p36, %p37
      %p39 = scmp.ne.s32.totalorder %s31, %s34
      %p40 = scmp.eq.s32.totalorder %s21, 0
      %p41 = por %p39, %p40
      %p42 = scmp.ne.s32.totalorder %s31, %s34
      %p43 = scmp.eq.s32.totalorder %s26, 1
      %p44 = por %p42, %p43
      %p45 = scmp.ne.s32.totalorder %s34, %s35
      %p46 = scmp.eq.s32.totalorder %s26, 0
      %p47 = por %p45, %p46
      %p48 = scmp.ne.s32.totalorder %s34, %s35
      %p49 = scmp.eq.s32.totalorder %s27, 1
      %p50 = por %p48, %p49
      %p52 = scmp.ne.s32.totalorder %s35, %s51
      %p53 = scmp.eq.s32.totalorder %s27, 0
      %p54 = por %p52, %p53
      %s56 = sadd.s32 %s55, 1
      %p59 = scmp.eq.s32.totalorder %s21, 1
      %p60 = scmp.ne.s32.totalorder %s55, %s57
      %p61 = scmp.eq.s32.totalorder %s21, 0
      %p62 = por %p60, %p61
      %p63 = scmp.ne.s32.totalorder %s55, %s57
      %p64 = scmp.eq.s32.totalorder %s26, 1
      %p65 = por %p63, %p64
      %p66 = scmp.ne.s32.totalorder %s57, %s58
      %p67 = scmp.eq.s32.totalorder %s26, 0
      %p68 = por %p66, %p67
      %p69 = scmp.ne.s32.totalorder %s57, %s58
      %p70 = scmp.eq.s32.totalorder %s27, 1
      %p71 = por %p69, %p70
      %p73 = scmp.ne.s32.totalorder %s58, %s72
      %p74 = scmp.eq.s32.totalorder %s27, 0
      %p75 = por %p73, %p74
      %s77 = sadd.s32 %s76, 1
      %p80 = scmp.eq.s32.totalorder %s21, 1
      %p81 = scmp.ne.s32.totalorder %s76, %s78
      %p82 = scmp.eq.s32.totalorder %s21, 0
      %p83 = por %p81, %p82
      %p84 = scmp.ne.s32.totalorder %s76, %s78
      %p85 = scmp.eq.s32.totalorder %s26, 1
      %p86 = por %p84, %p85
      %p87 = scmp.ne.s32.totalorder %s78, %s79
      %p88 = scmp.eq.s32.totalorder %s26, 0
      %p89 = por %p87, %p88
      %p90 = scmp.ne.s32.totalorder %s78, %s79
      %p91 = scmp.eq.s32.totalorder %s27, 1
      %p92 = por %p90, %p91
      %p94 = scmp.ne.s32.totalorder %s79, %s93
      %p95 = scmp.eq.s32.totalorder %s27, 0
      %p96 = por %p94, %p95
      %s98 = sadd.s32 %s97, 1
      %p101 = scmp.eq.s32.totalorder %s21, 1
      %p102 = scmp.ne.s32.totalorder %s97, %s99
      %p103 = scmp.eq.s32.totalorder %s21, 0
      %p104 = por %p102, %p103
      %p105 = scmp.ne.s32.totalorder %s97, %s99
      %p106 = scmp.eq.s32.totalorder %s26, 1
      %p107 = por %p105, %p106
      %p108 = scmp.ne.s32.totalorder %s99, %s100
      %p109 = scmp.eq.s32.totalorder %s26, 0
      %p110 = por %p108, %p109
      %p111 = scmp.ne.s32.totalorder %s99, %s100
      %p112 = scmp.eq.s32.totalorder %s27, 1
      %p113 = por %p111, %p112
      %p115 = scmp.ne.s32.totalorder %s100, %s114
      %p116 = scmp.eq.s32.totalorder %s27, 0
      %p117 = por %p115, %p116
      %s119 = sadd.s32 %s118, 1
      %p122 = scmp.eq.s32.totalorder %s21, 1
      %p123 = scmp.ne.s32.totalorder %s118, %s120
      %p124 = scmp.eq.s32.totalorder %s21, 0
      %p125 = por %p123, %p124
      %p126 = scmp.ne.s32.totalorder %s118, %s120
      %p127 = scmp.eq.s32.totalorder %s26, 1
      %p128 = por %p126, %p127
      %p129 = scmp.ne.s32.totalorder %s120, %s121
      %p130 = scmp.eq.s32.totalorder %s26, 0
      %p131 = por %p129, %p130
      %p132 = scmp.ne.s32.totalorder %s120, %s121
      %p133 = scmp.eq.s32.totalorder %s27, 1
      %p134 = por %p132, %p133
      %p136 = scmp.ne.s32.totalorder %s121, %s135
      %p137 = scmp.eq.s32.totalorder %s27, 0
      %p138 = por %p136, %p137
      %s140 = sadd.s32 %s139, 1
      %p143 = scmp.eq.s32.totalorder %s21, 1
      %p144 = scmp.ne.s32.totalorder %s139, %s141
      %p145 = scmp.eq.s32.totalorder %s21, 0
      %p146 = por %p144, %p145
      %p147 = scmp.ne.s32.totalorder %s139, %s141
      %p148 = scmp.eq.s32.totalorder %s26, 1
      %p149 = por %p147, %p148
      %p150 = scmp.ne.s32.totalorder %s141, %s142
      %p151 = scmp.eq.s32.totalorder %s26, 0
      %p152 = por %p150, %p151
      %p153 = scmp.ne.s32.totalorder %s141, %s142
      %p154 = scmp.eq.s32.totalorder %s27, 1
      %p155 = por %p153, %p154
      %p157 = scmp.ne.s32.totalorder %s142, %s156
      %p158 = scmp.eq.s32.totalorder %s27, 0
      %p159 = por %p157, %p158
      %s161 = sadd.s32 %s160, 1
      %p164 = scmp.eq.s32.totalorder %s21, 1
      %p165 = scmp.ne.s32.totalorder %s160, %s162
      %p166 = scmp.eq.s32.totalorder %s21, 0
      %p167 = por %p165, %p166
      %p168 = scmp.ne.s32.totalorder %s160, %s162
      %p169 = scmp.eq.s32.totalorder %s26, 1
      %p170 = por %p168, %p169
      %p171 = scmp.ne.s32.totalorder %s162, %s163
      %p172 = scmp.eq.s32.totalorder %s26, 0
      %p173 = por %p171, %p172
      %p174 = scmp.ne.s32.totalorder %s162, %s163
      %p175 = scmp.eq.s32.totalorder %s27, 1
      %p176 = por %p174, %p175
      %p178 = scmp.ne.s32.totalorder %s163, %s177
      %p179 = scmp.eq.s32.totalorder %s27, 0
      %p180 = por %p178, %p179
      %s181 = ssub.s32 %s21, %s28
      %p182 = scmp.eq.s32.totalorder %s181, 0
      %s184 = sadd.s32 %s183, 1
      %s185 = scalar_select %p182, %s183, %s184
      %p188 = pneg %p182
      %p189 = scmp.eq.s32.totalorder %s21, 1
      %p190 = por %p188, %p189
      %p191 = scmp.ne.s32.totalorder %s183, %s186
      %p192 = scmp.eq.s32.totalorder %s21, 0
      %p193 = por %p191, %p192
      %p194 = scmp.ne.s32.totalorder %s183, %s186
      %p195 = scmp.eq.s32.totalorder %s26, 1
      %p196 = por %p194, %p195
      %p197 = scmp.ne.s32.totalorder %s186, %s187
      %p198 = scmp.eq.s32.totalorder %s26, 0
      %p199 = por %p197, %p198
      %p200 = scmp.ne.s32.totalorder %s186, %s187
      %p201 = scmp.eq.s32.totalorder %s27, 1
      %p202 = por %p200, %p201
      %p204 = scmp.ne.s32.totalorder %s187, %s203
      %p205 = scmp.eq.s32.totalorder %s27, 0
      %p206 = por %p204, %p205
      %p207 = scmp.le.s32.totalorder 1, %s21
      %p208 = scmp.lt.s32.totalorder %s21, 3
      %p209 = pnand %p207, %p208
      %p210 = pneg %p209
      // Predicated region
      $region9: #{tpu_custom_call.1} parent=5 // pred_check
        _
      $region10: #{tpu_custom_call.1} parent=5 // pred_check_branch
        %212 = sbr.rel (%p209) target = $region12
      $region11: #{tpu_custom_call.1} parent=5 // pred_region
        %s213 = ssub.s32 %s21, 1
        // Predicated region
        $region13: #{tpu_custom_call.1} parent=11 // pred_check
          %p214 = pneg %p68
        $region14: #{tpu_custom_call.1} parent=11 // pred_check_branch
          %216 = sbr.rel (%p214) target = $region16
        $region15: #{tpu_custom_call.1} parent=11 // pred_region
          %s218 = ssub.s32 6144, 6144
          %219 = vsyncadd [#allocation7], %s218
          %s220 = sshll.u32 [#allocation6], 4
          %s221 = int_to_ptr.vmem [resolvable:$true] %s220
          %226 = dma.hbm_to_vmem [thread:$0]  %s1, 6144, %s221, [#allocation7], 384, 384, 24
        $region16: #{tpu_custom_call.1} parent=11 // pred_fallthru
          _
        // Predicated region
        $region17: #{tpu_custom_call.1} parent=11 // pred_check
          %p227 = pneg %p89
        $region18: #{tpu_custom_call.1} parent=11 // pred_check_branch
          %229 = sbr.rel (%p227) target = $region20
        $region19: #{tpu_custom_call.1} parent=11 // pred_region
          _
        $region20: #{tpu_custom_call.1} parent=11 // pred_fallthru
          _
        // Predicated region
        $region21: #{tpu_custom_call.1} parent=11 // pred_check
          %p230 = pneg %p110
        $region22: #{tpu_custom_call.1} parent=11 // pred_check_branch
          %232 = sbr.rel (%p230) target = $region24
        $region23: #{tpu_custom_call.1} parent=11 // pred_region
          %s234 = ssub.s32 2048, 2048
          %235 = vsyncadd [#allocation7], %s234
          %s236 = sshll.u32 [#allocation8], 4
          %s237 = int_to_ptr.vmem [resolvable:$true] %s236
          %242 = dma.hbm_to_vmem [thread:$0]  %s3, 2048, %s237, [#allocation7], 128, 128, 8
        $region24: #{tpu_custom_call.1} parent=11 // pred_fallthru
          _
        // Predicated region
        $region25: #{tpu_custom_call.1} parent=11 // pred_check
          %p243 = pneg %p131
        $region26: #{tpu_custom_call.1} parent=11 // pred_check_branch
          %245 = sbr.rel (%p243) target = $region28
        $region27: #{tpu_custom_call.1} parent=11 // pred_region
          _
        $region28: #{tpu_custom_call.1} parent=11 // pred_fallthru
          _
        // Predicated region
        $region29: #{tpu_custom_call.1} parent=11 // pred_check
          %p246 = pneg %p152
        $region30: #{tpu_custom_call.1} parent=11 // pred_check_branch
          %248 = sbr.rel (%p246) target = $region32
        $region31: #{tpu_custom_call.1} parent=11 // pred_region
          %s250 = ssub.s32 2048, 2048
          %251 = vsyncadd [#allocation10], %s250
          %s252 = sshll.u32 [#allocation9], 4
          %s253 = int_to_ptr.vmem [resolvable:$true] %s252
          %258 = dma.hbm_to_vmem [thread:$0]  %s5, 2048, %s253, [#allocation10], 128, 128, 8
        $region32: #{tpu_custom_call.1} parent=11 // pred_fallthru
          _
        // Predicated region
        $region33: #{tpu_custom_call.1} parent=11 // pred_check
          %p259 = pneg %p173
        $region34: #{tpu_custom_call.1} parent=11 // pred_check_branch
          %261 = sbr.rel (%p259) target = $region36
        $region35: #{tpu_custom_call.1} parent=11 // pred_region
          _
        $region36: #{tpu_custom_call.1} parent=11 // pred_fallthru
          _
      $region12: #{tpu_custom_call.1} parent=5 // pred_fallthru
        _
      %p262 = scmp.lt.s32.totalorder %s21, 2
      // Predicated region
      $region37: #{tpu_custom_call.1} parent=5 // pred_check
        %p263 = pneg %p262
      $region38: #{tpu_custom_call.1} parent=5 // pred_check_branch
        %265 = sbr.rel (%p263) target = $region40
      $region39: #{tpu_custom_call.1} parent=5 // pred_region
        // Predicated region
        $region41: #{tpu_custom_call.1} parent=39 // pred_check
          %p266 = pneg %p41
        $region42: #{tpu_custom_call.1} parent=39 // pred_check_branch
          %268 = sbr.rel (%p266) target = $region44
        $region43: #{tpu_custom_call.1} parent=39 // pred_region
          %s269 = sand.u32 %s31, 1
          %s270 = scalar_lea.sflag [#allocation4], %s269
          %s271 = sand.u32 %s31, 1
          %s272 = smul.addr %s271, 8
          %s273 = scalar_lea.vmem [#allocation3], %s272
          %s275 = ssub.s32 128, 128
          %276 = vsyncadd %s270, %s275
          %s277 = smul.addr %s21, 128
          %s278 = scalar_lea.hbm %s0, %s277
          %s280 = sshll.u32 %s273, 4
          %s281 = int_to_ptr.vmem [resolvable:$true] %s280
          %283 = dma.hbm_to_vmem [thread:$0]  %s278, 128, %s281, %s270
        $region44: #{tpu_custom_call.1} parent=39 // pred_fallthru
          _
      $region40: #{tpu_custom_call.1} parent=5 // pred_fallthru
        _
      %p284 = scmp.le.s32.totalorder 1, %s21
      %p285 = scmp.lt.s32.totalorder %s21, 3
      %p286 = pnand %p284, %p285
      %p287 = pneg %p286
      // Predicated region
      $region45: #{tpu_custom_call.1} parent=5 // pred_check
        _
      $region46: #{tpu_custom_call.1} parent=5 // pred_check_branch
        %289 = sbr.rel (%p286) target = $region48
      $region47: #{tpu_custom_call.1} parent=5 // pred_region
        %s290 = ssub.s32 %s21, 1
        %s291 = sand.u32 %s34, 1
        %s292 = scalar_lea.sflag [#allocation4], %s291
        %s293 = sand.u32 %s34, 1
        %s294 = smul.addr %s293, 8
        %s295 = scalar_lea.vmem [#allocation3], %s294
        // Predicated region
        $region49: #{tpu_custom_call.1} parent=47 // pred_check
          %p296 = pneg %p47
        $region50: #{tpu_custom_call.1} parent=47 // pred_check_branch
          %298 = sbr.rel (%p296) target = $region52
        $region51: #{tpu_custom_call.1} parent=47 // pred_region
          %299 = dma.done %s292, 128
        $region52: #{tpu_custom_call.1} parent=47 // pred_fallthru
          _
        // Predicated region
        $region53: #{tpu_custom_call.1} parent=47 // pred_check
          %p300 = pneg %p68
        $region54: #{tpu_custom_call.1} parent=47 // pred_check_branch
          %302 = sbr.rel (%p300) target = $region56
        $region55: #{tpu_custom_call.1} parent=47 // pred_region
          %303 = dma.done [#allocation7], 6144
        $region56: #{tpu_custom_call.1} parent=47 // pred_fallthru
          _
        // Predicated region
        $region57: #{tpu_custom_call.1} parent=47 // pred_check
          %p304 = pneg %p110
        $region58: #{tpu_custom_call.1} parent=47 // pred_check_branch
          %306 = sbr.rel (%p304) target = $region60
        $region59: #{tpu_custom_call.1} parent=47 // pred_region
          %307 = dma.done [#allocation7], 2048
        $region60: #{tpu_custom_call.1} parent=47 // pred_fallthru
          _
        // Predicated region
        $region61: #{tpu_custom_call.1} parent=47 // pred_check
          %p308 = pneg %p152
        $region62: #{tpu_custom_call.1} parent=47 // pred_check_branch
          %310 = sbr.rel (%p308) target = $region64
        $region63: #{tpu_custom_call.1} parent=47 // pred_region
          %311 = dma.done [#allocation10], 2048
        $region64: #{tpu_custom_call.1} parent=47 // pred_fallthru
          _
        %s312 = sand.u32 %s34, 1
        %s313 = scalar_lea.sflag [#allocation4], %s312
        %s314 = sand.u32 %s34, 1
        %s315 = smul.addr %s314, 8
        %s316 = scalar_lea.vmem [#allocation3], %s315
        %p317 = pneg %p47
        %p318 = pneg %p44
        %p319 = pneg %p68
        %p320 = pneg %p65
        %p321 = pneg %p89
        %p322 = pneg %p86
        %p323 = pneg %p110
        %p324 = pneg %p107
        %p325 = pneg %p131
        %p326 = pneg %p128
        %p327 = pneg %p152
        %p328 = pneg %p149
        %p329 = pneg %p173
        %p330 = pneg %p170
        %p331 = pneg %p199
        %p332 = pneg %p196
        %s333 = sand.u32 %s186, 1
        %s334 = scalar_lea.sflag [#allocation5], %s333
        %s335 = sand.u32 %s186, 1
        %s336 = smul.addr %s335, 8
        %s337 = scalar_lea.vmem [#allocation11], %s336
        %v338 = vld [vmem:[%s295] sm:$0xff]
        %v339 = vld [vmem:[#allocation6] sm:$0xff]
        %v340 = vld [vmem:[#allocation6 + $0x8] sm:$0xff]
        %v341 = vld [vmem:[#allocation6 + $0x10] sm:$0xff]
        %v342 = vld [vmem:[#allocation6 + $0x18] sm:$0xff]
        %v343 = vld [vmem:[#allocation6 + $0x20] sm:$0xff]
        %v344 = vld [vmem:[#allocation6 + $0x28] sm:$0xff]
        %v345 = vld [vmem:[#allocation6 + $0x30] sm:$0xff]
        %v346 = vld [vmem:[#allocation6 + $0x38] sm:$0xff]
        %v347 = vld [vmem:[#allocation6 + $0x40] sm:$0xff]
        %v348 = vld [vmem:[#allocation6 + $0x48] sm:$0xff]
        %v349 = vld [vmem:[#allocation6 + $0x50] sm:$0xff]
        %v350 = vld [vmem:[#allocation6 + $0x58] sm:$0xff]
        %v351 = vld [vmem:[#allocation6 + $0x60] sm:$0xff]
        %v352 = vld [vmem:[#allocation6 + $0x68] sm:$0xff]
        %v353 = vld [vmem:[#allocation6 + $0x70] sm:$0xff]
        %v354 = vld [vmem:[#allocation6 + $0x78] sm:$0xff]
        %v355 = vld [vmem:[#allocation6 + $0x80] sm:$0xff]
        %v356 = vld [vmem:[#allocation6 + $0x88] sm:$0xff]
        %v357 = vld [vmem:[#allocation6 + $0x90] sm:$0xff]
        %v358 = vld [vmem:[#allocation6 + $0x98] sm:$0xff]
        %v359 = vld [vmem:[#allocation6 + $0xa0] sm:$0xff]
        %v360 = vld [vmem:[#allocation6 + $0xa8] sm:$0xff]
        %v361 = vld [vmem:[#allocation6 + $0xb0] sm:$0xff]
        %v362 = vld [vmem:[#allocation6 + $0xb8] sm:$0xff]
        %v363 = vld [vmem:[#allocation6 + $0xc0] sm:$0xff]
        %v364 = vld [vmem:[#allocation6 + $0xc8] sm:$0xff]
        %v365 = vld [vmem:[#allocation6 + $0xd0] sm:$0xff]
        %v366 = vld [vmem:[#allocation6 + $0xd8] sm:$0xff]
        %v367 = vld [vmem:[#allocation6 + $0xe0] sm:$0xff]
        %v368 = vld [vmem:[#allocation6 + $0xe8] sm:$0xff]
        %v369 = vld [vmem:[#allocation6 + $0xf0] sm:$0xff]
        %v370 = vld [vmem:[#allocation6 + $0xf8] sm:$0xff]
        %v371 = vld [vmem:[#allocation6 + $0x100] sm:$0xff]
        %v372 = vld [vmem:[#allocation6 + $0x108] sm:$0xff]
        %v373 = vld [vmem:[#allocation6 + $0x110] sm:$0xff]
        %v374 = vld [vmem:[#allocation6 + $0x118] sm:$0xff]
        %v375 = vld [vmem:[#allocation6 + $0x120] sm:$0xff]
        %v376 = vld [vmem:[#allocation6 + $0x128] sm:$0xff]
        %v377 = vld [vmem:[#allocation6 + $0x130] sm:$0xff]
        %v378 = vld [vmem:[#allocation6 + $0x138] sm:$0xff]
        %v379 = vld [vmem:[#allocation6 + $0x140] sm:$0xff]
        %v380 = vld [vmem:[#allocation6 + $0x148] sm:$0xff]
        %v381 = vld [vmem:[#allocation6 + $0x150] sm:$0xff]
        %v382 = vld [vmem:[#allocation6 + $0x158] sm:$0xff]
        %v383 = vld [vmem:[#allocation6 + $0x160] sm:$0xff]
        %v384 = vld [vmem:[#allocation6 + $0x168] sm:$0xff]
        %v385 = vld [vmem:[#allocation6 + $0x170] sm:$0xff]
        %v386 = vld [vmem:[#allocation6 + $0x178] sm:$0xff]
        %v387 = vld [vmem:[%s2] sm:$0x7]
        %v389 = vlaneseq
        %v390 = vshrl.u32 %v389, 7
        %v391 = vsub.s32 0, %v390
        %v392 = vrot.slane %v387, %v391
        %v393 = vlaneseq
        %v394 = vshrl.u32 %v393, 7
        %v395 = vsub.s32 1, %v394
        %v396 = vrot.slane %v387, %v395
        %v397 = vlaneseq
        %v398 = vshrl.u32 %v397, 7
        %v399 = vsub.s32 2, %v398
        %v400 = vrot.slane %v387, %v399
        %404 = vmatprep.subr.mxu0 %v340
        %405 = vmatpush1.msra.mxu0 %v339
        %406 = vmatprep.subr.mxu0 %v343
        %407 = vmatpush1.msra.mxu0 %v342
        %408 = vmatprep.subr.mxu0 %v346
        %409 = vmatpush1.msra.mxu0 %v345
        %410 = vmatprep.subr.mxu0 %v349
        %411 = vmatpush1.msra.mxu0 %v348
        %412 = vmatprep.subr.mxu0 %v352
        %413 = vmatpush1.msra.mxu0 %v351
        %414 = vmatprep.subr.mxu0 %v355
        %415 = vmatpush1.msra.mxu0 %v354
        %416 = vmatprep.subr.mxu0 %v358
        %417 = vmatpush1.msra.mxu0 %v357
        %418 = vmatprep.subr.mxu0 %v361
        %419 = vmatpush1.msra.mxu0 %v360
        %420 = vmatprep.subr.mxu0 %v364
        %421 = vmatpush1.msra.mxu0 %v363
        %422 = vmatprep.subr.mxu0 %v367
        %423 = vmatpush1.msra.mxu0 %v366
        %424 = vmatprep.subr.mxu0 %v370
        %425 = vmatpush1.msra.mxu0 %v369
        %426 = vmatprep.subr.mxu0 %v373
        %427 = vmatpush1.msra.mxu0 %v372
        %428 = vmatprep.subr.mxu0 %v376
        %429 = vmatpush1.msra.mxu0 %v375
        %430 = vmatprep.subr.mxu0 %v379
        %431 = vmatpush1.msra.mxu0 %v378
        %432 = vmatprep.subr.mxu0 %v382
        %433 = vmatpush1.msra.mxu0 %v381
        %434 = vmatprep.subr.mxu0 %v385
        %435 = vmatpush1.msra.mxu0 %v384
        %436 = vmatprep.subr.mxu0 0.0
        %437 = vmatpush1.msra.mxu0 0.0
        %438 = vmatprep.subr.mxu0 0.0
        %439 = vmatpush1.msra.mxu0 0.0
        %440 = vmatprep.subr.mxu0 0.0
        %441 = vmatpush1.msra.mxu0 0.0
        %442 = vmatprep.subr.mxu0 0.0
        %443 = vmatpush1.msra.mxu0 0.0
        %444 = vmatprep.subr.mxu0 0.0
        %445 = vmatpush1.msra.mxu0 0.0
        %446 = vmatprep.subr.mxu0 0.0
        %447 = vmatpush1.msra.mxu0 0.0
        %448 = vmatprep.subr.mxu0 0.0
        %449 = vmatpush1.msra.mxu0 0.0
        %450 = vmatprep.subr.mxu0 0.0
        %451 = vmatpush1.msra.mxu0 0.0
        %452 = vmatprep.subr.mxu0 0.0
        %453 = vmatpush1.msra.mxu0 0.0
        %454 = vmatprep.subr.mxu0 0.0
        %455 = vmatpush1.msra.mxu0 0.0
        %456 = vmatprep.subr.mxu0 0.0
        %457 = vmatpush1.msra.mxu0 0.0
        %458 = vmatprep.subr.mxu0 0.0
        %459 = vmatpush1.msra.mxu0 0.0
        %460 = vmatprep.subr.mxu0 0.0
        %461 = vmatpush1.msra.mxu0 0.0
        %462 = vmatprep.subr.mxu0 0.0
        %463 = vmatpush1.msra.mxu0 0.0
        %464 = vmatprep.subr.mxu0 0.0
        %465 = vmatpush1.msra.mxu0 0.0
        %466 = vmatprep.subr.mxu0 0.0
        %467 = vmatpush1.msra.mxu0 0.0
        %468 = vmatprep.mubr.f32.mxu0 0.0
        %469 = vmatmul.mubr.f32.gmra.mrb[0].mxu0 %v338
        %v470 = vpop.f32.mrb[0].mxu0
        %v471 = vadd.f32 %v392, %v470
        %v472 = vpop.f32.mrb[0].mxu0
        %v473 = vadd.f32 %v396, %v472
        %474 = vdwg.mxu0
        %475 = vmatprep.subr.mxu0 0.0
        %476 = vmatpush1.msra.mxu0 %v341
        %477 = vmatprep.subr.mxu0 0.0
        %478 = vmatpush1.msra.mxu0 %v344
        %479 = vmatprep.subr.mxu0 0.0
        %480 = vmatpush1.msra.mxu0 %v347
        %481 = vmatprep.subr.mxu0 0.0
        %482 = vmatpush1.msra.mxu0 %v350
        %483 = vmatprep.subr.mxu0 0.0
        %484 = vmatpush1.msra.mxu0 %v353
        %485 = vmatprep.subr.mxu0 0.0
        %486 = vmatpush1.msra.mxu0 %v356
        %487 = vmatprep.subr.mxu0 0.0
        %488 = vmatpush1.msra.mxu0 %v359
        %489 = vmatprep.subr.mxu0 0.0
        %490 = vmatpush1.msra.mxu0 %v362
        %491 = vmatprep.subr.mxu0 0.0
        %492 = vmatpush1.msra.mxu0 %v365
        %493 = vmatprep.subr.mxu0 0.0
        %494 = vmatpush1.msra.mxu0 %v368
        %495 = vmatprep.subr.mxu0 0.0
        %496 = vmatpush1.msra.mxu0 %v371
        %497 = vmatprep.subr.mxu0 0.0
        %498 = vmatpush1.msra.mxu0 %v374
        %499 = vmatprep.subr.mxu0 0.0
        %500 = vmatpush1.msra.mxu0 %v377
        %501 = vmatprep.subr.mxu0 0.0
        %502 = vmatpush1.msra.mxu0 %v380
        %503 = vmatprep.subr.mxu0 0.0
        %504 = vmatpush1.msra.mxu0 %v383
        %505 = vmatprep.subr.mxu0 0.0
        %506 = vmatpush1.msra.mxu0 %v386
        %507 = vmatprep.subr.mxu0 0.0
        %508 = vmatpush1.msra.mxu0 0.0
        %509 = vmatprep.subr.mxu0 0.0
        %510 = vmatpush1.msra.mxu0 0.0
        %511 = vmatprep.subr.mxu0 0.0
        %512 = vmatpush1.msra.mxu0 0.0
        %513 = vmatprep.subr.mxu0 0.0
        %514 = vmatpush1.msra.mxu0 0.0
        %515 = vmatprep.subr.mxu0 0.0
        %516 = vmatpush1.msra.mxu0 0.0
        %517 = vmatprep.subr.mxu0 0.0
        %518 = vmatpush1.msra.mxu0 0.0
        %519 = vmatprep.subr.mxu0 0.0
        %520 = vmatpush1.msra.mxu0 0.0
        %521 = vmatprep.subr.mxu0 0.0
        %522 = vmatpush1.msra.mxu0 0.0
        %523 = vmatprep.subr.mxu0 0.0
        %524 = vmatpush1.msra.mxu0 0.0
        %525 = vmatprep.subr.mxu0 0.0
        %526 = vmatpush1.msra.mxu0 0.0
        %527 = vmatprep.subr.mxu0 0.0
        %528 = vmatpush1.msra.mxu0 0.0
        %529 = vmatprep.subr.mxu0 0.0
        %530 = vmatpush1.msra.mxu0 0.0
        %531 = vmatprep.subr.mxu0 0.0
        %532 = vmatpush1.msra.mxu0 0.0
        %533 = vmatprep.subr.mxu0 0.0
        %534 = vmatpush1.msra.mxu0 0.0
        %535 = vmatprep.subr.mxu0 0.0
        %536 = vmatpush1.msra.mxu0 0.0
        %537 = vmatprep.subr.mxu0 0.0
        %538 = vmatpush1.msra.mxu0 0.0
        %539 = vmatprep.mubr.f32.mxu0 0.0
        %540 = vmatmul.mubr.f32.gmra.mrb[0].mxu0 %v338
        %v541 = vpop.f32.mrb[0].mxu0
        %v542 = vadd.f32 %v400, %v541
        %v543 = vpop.f32.mrb[0].mxu0
        %544 = vdwg.mxu0
        %v545 = vlaneseq
        %v546 = vshrl.u32 %v545, 7
        %v547 = vlaneseq
        %v548 = vand.u32 %v547, 127
        %vm549 = vcmp.ge.s32.totalorder %v546, %v548
        %v550 = vsel %vm549, 1, 0
        %v551 = vcvt.s32.f32 %v550
        %vm552 = vcmask 261120
        %v554 = vsel %vm552, %v471, 0
        %v557 = vsel %vm552, %v473, 0
        %559 = vmatprep.subr.mxu0 0.0
        %560 = vmatpush1.xpose.msra.mxu0 %v557
        %561 = vmatprep.subr.mxu0 0.0
        %562 = vmatpush1.xpose.msra.mxu0 0.0
        %563 = vmatprep.subr.mxu0 0.0
        %564 = vmatpush1.xpose.msra.mxu0 0.0
        %565 = vmatprep.subr.mxu0 0.0
        %566 = vmatpush1.xpose.msra.mxu0 0.0
        %567 = vmatprep.subr.mxu0 0.0
        %568 = vmatpush1.xpose.msra.mxu0 0.0
        %569 = vmatprep.subr.mxu0 0.0
        %570 = vmatpush1.xpose.msra.mxu0 0.0
        %571 = vmatprep.subr.mxu0 0.0
        %572 = vmatpush1.xpose.msra.mxu0 0.0
        %573 = vmatprep.subr.mxu0 0.0
        %574 = vmatpush1.xpose.msra.mxu0 0.0
        %575 = vmatprep.subr.mxu0 0.0
        %576 = vmatpush1.xpose.msra.mxu0 0.0
        %577 = vmatprep.subr.mxu0 0.0
        %578 = vmatpush1.xpose.msra.mxu0 0.0
        %579 = vmatprep.subr.mxu0 0.0
        %580 = vmatpush1.xpose.msra.mxu0 0.0
        %581 = vmatprep.subr.mxu0 0.0
        %582 = vmatpush1.xpose.msra.mxu0 0.0
        %583 = vmatprep.subr.mxu0 0.0
        %584 = vmatpush1.xpose.msra.mxu0 0.0
        %585 = vmatprep.subr.mxu0 0.0
        %586 = vmatpush1.xpose.msra.mxu0 0.0
        %587 = vmatprep.subr.mxu0 0.0
        %588 = vmatpush1.xpose.msra.mxu0 0.0
        %589 = vmatprep.subr.mxu0 0.0
        %590 = vmatpush1.xpose.msra.mxu0 0.0
        %591 = vmatprep.subr.mxu0 0.0
        %592 = vmatpush1.xpose.msra.mxu0 0.0
        %593 = vmatprep.subr.mxu0 0.0
        %594 = vmatpush1.xpose.msra.mxu0 0.0
        %595 = vmatprep.subr.mxu0 0.0
        %596 = vmatpush1.xpose.msra.mxu0 0.0
        %597 = vmatprep.subr.mxu0 0.0
        %598 = vmatpush1.xpose.msra.mxu0 0.0
        %599 = vmatprep.subr.mxu0 0.0
        %600 = vmatpush1.xpose.msra.mxu0 0.0
        %601 = vmatprep.subr.mxu0 0.0
        %602 = vmatpush1.xpose.msra.mxu0 0.0
        %603 = vmatprep.subr.mxu0 0.0
        %604 = vmatpush1.xpose.msra.mxu0 0.0
        %605 = vmatprep.subr.mxu0 0.0
        %606 = vmatpush1.xpose.msra.mxu0 0.0
        %607 = vmatprep.subr.mxu0 0.0
        %608 = vmatpush1.xpose.msra.mxu0 0.0
        %609 = vmatprep.subr.mxu0 0.0
        %610 = vmatpush1.xpose.msra.mxu0 0.0
        %611 = vmatprep.subr.mxu0 0.0
        %612 = vmatpush1.xpose.msra.mxu0 0.0
        %613 = vmatprep.subr.mxu0 0.0
        %614 = vmatpush1.xpose.msra.mxu0 0.0
        %615 = vmatprep.subr.mxu0 0.0
        %616 = vmatpush1.xpose.msra.mxu0 0.0
        %617 = vmatprep.subr.mxu0 0.0
        %618 = vmatpush1.xpose.msra.mxu0 0.0
        %619 = vmatprep.subr.mxu0 0.0
        %620 = vmatpush1.xpose.msra.mxu0 0.0
        %621 = vmatprep.subr.mxu0 0.0
        %622 = vmatpush1.xpose.msra.mxu0 0.0
        %623 = vmatprep.mubr.f32.mxu0 0.0
        %624 = vmatmul.mubr.f32.gmra.mrb[0].mxu0 %v554
        %v625 = vpop.f32.mrb[0].mxu0
        %v626 = vadd.f32 %v551, %v625
        %v627 = vpop.f32.mrb[0].mxu0
        %628 = vdwg.mxu0
        %vm629 = vcmask 64512
        %v630 = vsel %vm629, %v626, -inf
        %631 = vmax.xlane.f32.xlu0 %v630
        %v632 = vpop.xlane.xlu0 %631
        %v633 = vsub.f32 %v626, %v632
        %v634 = vmul.f32 %v633, 1.442695
        %v635 = vpow.pop %v634
        %v636 = vsel %vm629, %v635, 0.0
        %637 = vadd.xlane.f32.xlu0 %v636
        %v638 = vpop.xlane.xlu0 %637
        %v640 = vsel %vm629, %v635, 0
        %642 = vmatprep.subr.mxu0 0.0
        %643 = vmatpush1.msra.mxu0 %v542
        %644 = vmatprep.subr.mxu0 0.0
        %645 = vmatpush1.msra.mxu0 0.0
        %646 = vmatprep.subr.mxu0 0.0
        %647 = vmatpush1.msra.mxu0 0.0
        %648 = vmatprep.subr.mxu0 0.0
        %649 = vmatpush1.msra.mxu0 0.0
        %650 = vmatprep.subr.mxu0 0.0
        %651 = vmatpush1.msra.mxu0 0.0
        %652 = vmatprep.subr.mxu0 0.0
        %653 = vmatpush1.msra.mxu0 0.0
        %654 = vmatprep.subr.mxu0 0.0
        %655 = vmatpush1.msra.mxu0 0.0
        %656 = vmatprep.subr.mxu0 0.0
        %657 = vmatpush1.msra.mxu0 0.0
        %658 = vmatprep.subr.mxu0 0.0
        %659 = vmatpush1.msra.mxu0 0.0
        %660 = vmatprep.subr.mxu0 0.0
        %661 = vmatpush1.msra.mxu0 0.0
        %662 = vmatprep.subr.mxu0 0.0
        %663 = vmatpush1.msra.mxu0 0.0
        %664 = vmatprep.subr.mxu0 0.0
        %665 = vmatpush1.msra.mxu0 0.0
        %666 = vmatprep.subr.mxu0 0.0
        %667 = vmatpush1.msra.mxu0 0.0
        %668 = vmatprep.subr.mxu0 0.0
        %669 = vmatpush1.msra.mxu0 0.0
        %670 = vmatprep.subr.mxu0 0.0
        %671 = vmatpush1.msra.mxu0 0.0
        %672 = vmatprep.subr.mxu0 0.0
        %673 = vmatpush1.msra.mxu0 0.0
        %674 = vmatprep.subr.mxu0 0.0
        %675 = vmatpush1.msra.mxu0 0.0
        %676 = vmatprep.subr.mxu0 0.0
        %677 = vmatpush1.msra.mxu0 0.0
        %678 = vmatprep.subr.mxu0 0.0
        %679 = vmatpush1.msra.mxu0 0.0
        %680 = vmatprep.subr.mxu0 0.0
        %681 = vmatpush1.msra.mxu0 0.0
        %682 = vmatprep.subr.mxu0 0.0
        %683 = vmatpush1.msra.mxu0 0.0
        %684 = vmatprep.subr.mxu0 0.0
        %685 = vmatpush1.msra.mxu0 0.0
        %686 = vmatprep.subr.mxu0 0.0
        %687 = vmatpush1.msra.mxu0 0.0
        %688 = vmatprep.subr.mxu0 0.0
        %689 = vmatpush1.msra.mxu0 0.0
        %690 = vmatprep.subr.mxu0 0.0
        %691 = vmatpush1.msra.mxu0 0.0
        %692 = vmatprep.subr.mxu0 0.0
        %693 = vmatpush1.msra.mxu0 0.0
        %694 = vmatprep.subr.mxu0 0.0
        %695 = vmatpush1.msra.mxu0 0.0
        %696 = vmatprep.subr.mxu0 0.0
        %697 = vmatpush1.msra.mxu0 0.0
        %698 = vmatprep.subr.mxu0 0.0
        %699 = vmatpush1.msra.mxu0 0.0
        %700 = vmatprep.subr.mxu0 0.0
        %701 = vmatpush1.msra.mxu0 0.0
        %702 = vmatprep.subr.mxu0 0.0
        %703 = vmatpush1.msra.mxu0 0.0
        %704 = vmatprep.subr.mxu0 0.0
        %705 = vmatpush1.msra.mxu0 0.0
        %706 = vmatprep.mubr.f32.mxu0 0.0
        %707 = vmatmul.mubr.f32.gmra.mrb[0].mxu0 %v640
        %v708 = vpop.f32.mrb[0].mxu0
        %v709 = vadd.f32 0.0, %v708
        %v710 = vpop.f32.mrb[0].mxu0
        %711 = vdwg.mxu0
        %v712 = vrcp.pop %v638
        %v713 = vmul.f32 %v709, %v712
        %714 = vst.msk [vmem:[#allocation2] sm:$0xff] %vm552, %v713
        %715 = vrot.lane.b32.xlu0 %v471, 96
        %v716 = vpop.permute.xlu0 %715
        %717 = vrot.lane.b32.xlu0 %v473, 96
        %v718 = vpop.permute.xlu0 %717
        %v719 = vsel %vm552, %v716, 0
        %v721 = vsel %vm552, %v718, 0
        %723 = vmatprep.subr.mxu0 0.0
        %724 = vmatpush1.xpose.msra.mxu0 %v721
        %725 = vmatprep.subr.mxu0 0.0
        %726 = vmatpush1.xpose.msra.mxu0 0.0
        %727 = vmatprep.subr.mxu0 0.0
        %728 = vmatpush1.xpose.msra.mxu0 0.0
        %729 = vmatprep.subr.mxu0 0.0
        %730 = vmatpush1.xpose.msra.mxu0 0.0
        %731 = vmatprep.subr.mxu0 0.0
        %732 = vmatpush1.xpose.msra.mxu0 0.0
        %733 = vmatprep.subr.mxu0 0.0
        %734 = vmatpush1.xpose.msra.mxu0 0.0
        %735 = vmatprep.subr.mxu0 0.0
        %736 = vmatpush1.xpose.msra.mxu0 0.0
        %737 = vmatprep.subr.mxu0 0.0
        %738 = vmatpush1.xpose.msra.mxu0 0.0
        %739 = vmatprep.subr.mxu0 0.0
        %740 = vmatpush1.xpose.msra.mxu0 0.0
        %741 = vmatprep.subr.mxu0 0.0
        %742 = vmatpush1.xpose.msra.mxu0 0.0
        %743 = vmatprep.subr.mxu0 0.0
        %744 = vmatpush1.xpose.msra.mxu0 0.0
        %745 = vmatprep.subr.mxu0 0.0
        %746 = vmatpush1.xpose.msra.mxu0 0.0
        %747 = vmatprep.subr.mxu0 0.0
        %748 = vmatpush1.xpose.msra.mxu0 0.0
        %749 = vmatprep.subr.mxu0 0.0
        %750 = vmatpush1.xpose.msra.mxu0 0.0
        %751 = vmatprep.subr.mxu0 0.0
        %752 = vmatpush1.xpose.msra.mxu0 0.0
        %753 = vmatprep.subr.mxu0 0.0
        %754 = vmatpush1.xpose.msra.mxu0 0.0
        %755 = vmatprep.subr.mxu0 0.0
        %756 = vmatpush1.xpose.msra.mxu0 0.0
        %757 = vmatprep.subr.mxu0 0.0
        %758 = vmatpush1.xpose.msra.mxu0 0.0
        %759 = vmatprep.subr.mxu0 0.0
        %760 = vmatpush1.xpose.msra.mxu0 0.0
        %761 = vmatprep.subr.mxu0 0.0
        %762 = vmatpush1.xpose.msra.mxu0 0.0
        %763 = vmatprep.subr.mxu0 0.0
        %764 = vmatpush1.xpose.msra.mxu0 0.0
        %765 = vmatprep.subr.mxu0 0.0
        %766 = vmatpush1.xpose.msra.mxu0 0.0
        %767 = vmatprep.subr.mxu0 0.0
        %768 = vmatpush1.xpose.msra.mxu0 0.0
        %769 = vmatprep.subr.mxu0 0.0
        %770 = vmatpush1.xpose.msra.mxu0 0.0
        %771 = vmatprep.subr.mxu0 0.0
        %772 = vmatpush1.xpose.msra.mxu0 0.0
        %773 = vmatprep.subr.mxu0 0.0
        %774 = vmatpush1.xpose.msra.mxu0 0.0
        %775 = vmatprep.subr.mxu0 0.0
        %776 = vmatpush1.xpose.msra.mxu0 0.0
        %777 = vmatprep.subr.mxu0 0.0
        %778 = vmatpush1.xpose.msra.mxu0 0.0
        %779 = vmatprep.subr.mxu0 0.0
        %780 = vmatpush1.xpose.msra.mxu0 0.0
        %781 = vmatprep.subr.mxu0 0.0
        %782 = vmatpush1.xpose.msra.mxu0 0.0
        %783 = vmatprep.subr.mxu0 0.0
        %784 = vmatpush1.xpose.msra.mxu0 0.0
        %785 = vmatprep.subr.mxu0 0.0
        %786 = vmatpush1.xpose.msra.mxu0 0.0
        %787 = vmatprep.mubr.f32.mxu0 0.0
        %788 = vmatmul.mubr.f32.gmra.mrb[0].mxu0 %v719
        %v789 = vpop.f32.mrb[0].mxu0
        %v790 = vadd.f32 %v551, %v789
        %v791 = vpop.f32.mrb[0].mxu0
        %792 = vdwg.mxu0
        %v793 = vsel %vm629, %v790, -inf
        %794 = vmax.xlane.f32.xlu0 %v793
        %v795 = vpop.xlane.xlu0 %794
        %v796 = vsub.f32 %v790, %v795
        %v797 = vmul.f32 %v796, 1.442695
        %v798 = vpow.pop %v797
        %v799 = vsel %vm629, %v798, 0.0
        %800 = vadd.xlane.f32.xlu0 %v799
        %v801 = vpop.xlane.xlu0 %800
        %803 = vrot.lane.b32.xlu0 %v542, 96
        %v804 = vpop.permute.xlu0 %803
        %v807 = vsel %vm629, %v798, 0
        %809 = vmatprep.subr.mxu0 0.0
        %810 = vmatpush1.msra.mxu0 %v804
        %811 = vmatprep.subr.mxu0 0.0
        %812 = vmatpush1.msra.mxu0 0.0
        %813 = vmatprep.subr.mxu0 0.0
        %814 = vmatpush1.msra.mxu0 0.0
        %815 = vmatprep.subr.mxu0 0.0
        %816 = vmatpush1.msra.mxu0 0.0
        %817 = vmatprep.subr.mxu0 0.0
        %818 = vmatpush1.msra.mxu0 0.0
        %819 = vmatprep.subr.mxu0 0.0
        %820 = vmatpush1.msra.mxu0 0.0
        %821 = vmatprep.subr.mxu0 0.0
        %822 = vmatpush1.msra.mxu0 0.0
        %823 = vmatprep.subr.mxu0 0.0
        %824 = vmatpush1.msra.mxu0 0.0
        %825 = vmatprep.subr.mxu0 0.0
        %826 = vmatpush1.msra.mxu0 0.0
        %827 = vmatprep.subr.mxu0 0.0
        %828 = vmatpush1.msra.mxu0 0.0
        %829 = vmatprep.subr.mxu0 0.0
        %830 = vmatpush1.msra.mxu0 0.0
        %831 = vmatprep.subr.mxu0 0.0
        %832 = vmatpush1.msra.mxu0 0.0
        %833 = vmatprep.subr.mxu0 0.0
        %834 = vmatpush1.msra.mxu0 0.0
        %835 = vmatprep.subr.mxu0 0.0
        %836 = vmatpush1.msra.mxu0 0.0
        %837 = vmatprep.subr.mxu0 0.0
        %838 = vmatpush1.msra.mxu0 0.0
        %839 = vmatprep.subr.mxu0 0.0
        %840 = vmatpush1.msra.mxu0 0.0
        %841 = vmatprep.subr.mxu0 0.0
        %842 = vmatpush1.msra.mxu0 0.0
        %843 = vmatprep.subr.mxu0 0.0
        %844 = vmatpush1.msra.mxu0 0.0
        %845 = vmatprep.subr.mxu0 0.0
        %846 = vmatpush1.msra.mxu0 0.0
        %847 = vmatprep.subr.mxu0 0.0
        %848 = vmatpush1.msra.mxu0 0.0
        %849 = vmatprep.subr.mxu0 0.0
        %850 = vmatpush1.msra.mxu0 0.0
        %851 = vmatprep.subr.mxu0 0.0
        %852 = vmatpush1.msra.mxu0 0.0
        %853 = vmatprep.subr.mxu0 0.0
        %854 = vmatpush1.msra.mxu0 0.0
        %855 = vmatprep.subr.mxu0 0.0
        %856 = vmatpush1.msra.mxu0 0.0
        %857 = vmatprep.subr.mxu0 0.0
        %858 = vmatpush1.msra.mxu0 0.0
        %859 = vmatprep.subr.mxu0 0.0
        %860 = vmatpush1.msra.mxu0 0.0
        %861 = vmatprep.subr.mxu0 0.0
        %862 = vmatpush1.msra.mxu0 0.0
        %863 = vmatprep.subr.mxu0 0.0
        %864 = vmatpush1.msra.mxu0 0.0
        %865 = vmatprep.subr.mxu0 0.0
        %866 = vmatpush1.msra.mxu0 0.0
        %867 = vmatprep.subr.mxu0 0.0
        %868 = vmatpush1.msra.mxu0 0.0
        %869 = vmatprep.subr.mxu0 0.0
        %870 = vmatpush1.msra.mxu0 0.0
        %871 = vmatprep.subr.mxu0 0.0
        %872 = vmatpush1.msra.mxu0 0.0
        %873 = vmatprep.mubr.f32.mxu0 0.0
        %874 = vmatmul.mubr.f32.gmra.mrb[0].mxu0 %v807
        %v875 = vpop.f32.mrb[0].mxu0
        %v876 = vadd.f32 0.0, %v875
        %v877 = vpop.f32.mrb[0].mxu0
        %878 = vdwg.mxu0
        %v879 = vrcp.pop %v801
        %v880 = vmul.f32 %v876, %v879
        %882 = vrot.lane.b32.xlu0 %v880, 32
        %v883 = vpop.permute.xlu0 %882
        %vm885 = vcmask 523520
        %886 = vst.msk [vmem:[#allocation2] sm:$0xff] %vm885, %v883
        %887 = vrot.lane.b32.xlu0 %v471, 64
        %v888 = vpop.permute.xlu0 %887
        %889 = vrot.lane.b32.xlu0 %v473, 64
        %v890 = vpop.permute.xlu0 %889
        %v891 = vsel %vm552, %v888, 0
        %v893 = vsel %vm552, %v890, 0
        %895 = vmatprep.subr.mxu0 0.0
        %896 = vmatpush1.xpose.msra.mxu0 %v893
        %897 = vmatprep.subr.mxu0 0.0
        %898 = vmatpush1.xpose.msra.mxu0 0.0
        %899 = vmatprep.subr.mxu0 0.0
        %900 = vmatpush1.xpose.msra.mxu0 0.0
        %901 = vmatprep.subr.mxu0 0.0
        %902 = vmatpush1.xpose.msra.mxu0 0.0
        %903 = vmatprep.subr.mxu0 0.0
        %904 = vmatpush1.xpose.msra.mxu0 0.0
        %905 = vmatprep.subr.mxu0 0.0
        %906 = vmatpush1.xpose.msra.mxu0 0.0
        %907 = vmatprep.subr.mxu0 0.0
        %908 = vmatpush1.xpose.msra.mxu0 0.0
        %909 = vmatprep.subr.mxu0 0.0
        %910 = vmatpush1.xpose.msra.mxu0 0.0
        %911 = vmatprep.subr.mxu0 0.0
        %912 = vmatpush1.xpose.msra.mxu0 0.0
        %913 = vmatprep.subr.mxu0 0.0
        %914 = vmatpush1.xpose.msra.mxu0 0.0
        %915 = vmatprep.subr.mxu0 0.0
        %916 = vmatpush1.xpose.msra.mxu0 0.0
        %917 = vmatprep.subr.mxu0 0.0
        %918 = vmatpush1.xpose.msra.mxu0 0.0
        %919 = vmatprep.subr.mxu0 0.0
        %920 = vmatpush1.xpose.msra.mxu0 0.0
        %921 = vmatprep.subr.mxu0 0.0
        %922 = vmatpush1.xpose.msra.mxu0 0.0
        %923 = vmatprep.subr.mxu0 0.0
        %924 = vmatpush1.xpose.msra.mxu0 0.0
        %925 = vmatprep.subr.mxu0 0.0
        %926 = vmatpush1.xpose.msra.mxu0 0.0
        %927 = vmatprep.subr.mxu0 0.0
        %928 = vmatpush1.xpose.msra.mxu0 0.0
        %929 = vmatprep.subr.mxu0 0.0
        %930 = vmatpush1.xpose.msra.mxu0 0.0
        %931 = vmatprep.subr.mxu0 0.0
        %932 = vmatpush1.xpose.msra.mxu0 0.0
        %933 = vmatprep.subr.mxu0 0.0
        %934 = vmatpush1.xpose.msra.mxu0 0.0
        %935 = vmatprep.subr.mxu0 0.0
        %936 = vmatpush1.xpose.msra.mxu0 0.0
        %937 = vmatprep.subr.mxu0 0.0
        %938 = vmatpush1.xpose.msra.mxu0 0.0
        %939 = vmatprep.subr.mxu0 0.0
        %940 = vmatpush1.xpose.msra.mxu0 0.0
        %941 = vmatprep.subr.mxu0 0.0
        %942 = vmatpush1.xpose.msra.mxu0 0.0
        %943 = vmatprep.subr.mxu0 0.0
        %944 = vmatpush1.xpose.msra.mxu0 0.0
        %945 = vmatprep.subr.mxu0 0.0
        %946 = vmatpush1.xpose.msra.mxu0 0.0
        %947 = vmatprep.subr.mxu0 0.0
        %948 = vmatpush1.xpose.msra.mxu0 0.0
        %949 = vmatprep.subr.mxu0 0.0
        %950 = vmatpush1.xpose.msra.mxu0 0.0
        %951 = vmatprep.subr.mxu0 0.0
        %952 = vmatpush1.xpose.msra.mxu0 0.0
        %953 = vmatprep.subr.mxu0 0.0
        %954 = vmatpush1.xpose.msra.mxu0 0.0
        %955 = vmatprep.subr.mxu0 0.0
        %956 = vmatpush1.xpose.msra.mxu0 0.0
        %957 = vmatprep.subr.mxu0 0.0
        %958 = vmatpush1.xpose.msra.mxu0 0.0
        %959 = vmatprep.mubr.f32.mxu0 0.0
        %960 = vmatmul.mubr.f32.gmra.mrb[0].mxu0 %v891
        %v961 = vpop.f32.mrb[0].mxu0
        %v962 = vadd.f32 %v551, %v961
        %v963 = vpop.f32.mrb[0].mxu0
        %964 = vdwg.mxu0
        %v965 = vsel %vm629, %v962, -inf
        %966 = vmax.xlane.f32.xlu0 %v965
        %v967 = vpop.xlane.xlu0 %966
        %v968 = vsub.f32 %v962, %v967
        %v969 = vmul.f32 %v968, 1.442695
        %v970 = vpow.pop %v969
        %v971 = vsel %vm629, %v970, 0.0
        %972 = vadd.xlane.f32.xlu0 %v971
        %v973 = vpop.xlane.xlu0 %972
        %974 = vrot.lane.b32.xlu0 %v542, 64
        %v975 = vpop.permute.xlu0 %974
        %v978 = vsel %vm629, %v970, 0
        %980 = vmatprep.subr.mxu0 0.0
        %981 = vmatpush1.msra.mxu0 %v975
        %982 = vmatprep.subr.mxu0 0.0
        %983 = vmatpush1.msra.mxu0 0.0
        %984 = vmatprep.subr.mxu0 0.0
        %985 = vmatpush1.msra.mxu0 0.0
        %986 = vmatprep.subr.mxu0 0.0
        %987 = vmatpush1.msra.mxu0 0.0
        %988 = vmatprep.subr.mxu0 0.0
        %989 = vmatpush1.msra.mxu0 0.0
        %990 = vmatprep.subr.mxu0 0.0
        %991 = vmatpush1.msra.mxu0 0.0
        %992 = vmatprep.subr.mxu0 0.0
        %993 = vmatpush1.msra.mxu0 0.0
        %994 = vmatprep.subr.mxu0 0.0
        %995 = vmatpush1.msra.mxu0 0.0
        %996 = vmatprep.subr.mxu0 0.0
        %997 = vmatpush1.msra.mxu0 0.0
        %998 = vmatprep.subr.mxu0 0.0
        %999 = vmatpush1.msra.mxu0 0.0
        %1000 = vmatprep.subr.mxu0 0.0
        %1001 = vmatpush1.msra.mxu0 0.0
        %1002 = vmatprep.subr.mxu0 0.0
        %1003 = vmatpush1.msra.mxu0 0.0
        %1004 = vmatprep.subr.mxu0 0.0
        %1005 = vmatpush1.msra.mxu0 0.0
        %1006 = vmatprep.subr.mxu0 0.0
        %1007 = vmatpush1.msra.mxu0 0.0
        %1008 = vmatprep.subr.mxu0 0.0
        %1009 = vmatpush1.msra.mxu0 0.0
        %1010 = vmatprep.subr.mxu0 0.0
        %1011 = vmatpush1.msra.mxu0 0.0
        %1012 = vmatprep.subr.mxu0 0.0
        %1013 = vmatpush1.msra.mxu0 0.0
        %1014 = vmatprep.subr.mxu0 0.0
        %1015 = vmatpush1.msra.mxu0 0.0
        %1016 = vmatprep.subr.mxu0 0.0
        %1017 = vmatpush1.msra.mxu0 0.0
        %1018 = vmatprep.subr.mxu0 0.0
        %1019 = vmatpush1.msra.mxu0 0.0
        %1020 = vmatprep.subr.mxu0 0.0
        %1021 = vmatpush1.msra.mxu0 0.0
        %1022 = vmatprep.subr.mxu0 0.0
        %1023 = vmatpush1.msra.mxu0 0.0
        %1024 = vmatprep.subr.mxu0 0.0
        %1025 = vmatpush1.msra.mxu0 0.0
        %1026 = vmatprep.subr.mxu0 0.0
        %1027 = vmatpush1.msra.mxu0 0.0
        %1028 = vmatprep.subr.mxu0 0.0
        %1029 = vmatpush1.msra.mxu0 0.0
        %1030 = vmatprep.subr.mxu0 0.0
        %1031 = vmatpush1.msra.mxu0 0.0
        %1032 = vmatprep.subr.mxu0 0.0
        %1033 = vmatpush1.msra.mxu0 0.0
        %1034 = vmatprep.subr.mxu0 0.0
        %1035 = vmatpush1.msra.mxu0 0.0
        %1036 = vmatprep.subr.mxu0 0.0
        %1037 = vmatpush1.msra.mxu0 0.0
        %1038 = vmatprep.subr.mxu0 0.0
        %1039 = vmatpush1.msra.mxu0 0.0
        %1040 = vmatprep.subr.mxu0 0.0
        %1041 = vmatpush1.msra.mxu0 0.0
        %1042 = vmatprep.subr.mxu0 0.0
        %1043 = vmatpush1.msra.mxu0 0.0
        %1044 = vmatprep.mubr.f32.mxu0 0.0
        %1045 = vmatmul.mubr.f32.gmra.mrb[0].mxu0 %v978
        %v1046 = vpop.f32.mrb[0].mxu0
        %v1047 = vadd.f32 0.0, %v1046
        %v1048 = vpop.f32.mrb[0].mxu0
        %1049 = vdwg.mxu0
        %v1050 = vrcp.pop %v973
        %v1051 = vmul.f32 %v1047, %v1050
        %1053 = vrot.lane.b32.xlu0 %v1051, 64
        %v1054 = vpop.permute.xlu0 %1053
        %vm1056 = vcmask 785920
        %1057 = vst.msk [vmem:[#allocation2] sm:$0xff] %vm1056, %v1054
        %1058 = vrot.lane.b32.xlu0 %v471, 32
        %v1059 = vpop.permute.xlu0 %1058
        %1060 = vrot.lane.b32.xlu0 %v473, 32
        %v1061 = vpop.permute.xlu0 %1060
        %v1062 = vsel %vm552, %v1059, 0
        %v1064 = vsel %vm552, %v1061, 0
        %1066 = vmatprep.subr.mxu0 0.0
        %1067 = vmatpush1.xpose.msra.mxu0 %v1064
        %1068 = vmatprep.subr.mxu0 0.0
        %1069 = vmatpush1.xpose.msra.mxu0 0.0
        %1070 = vmatprep.subr.mxu0 0.0
        %1071 = vmatpush1.xpose.msra.mxu0 0.0
        %1072 = vmatprep.subr.mxu0 0.0
        %1073 = vmatpush1.xpose.msra.mxu0 0.0
        %1074 = vmatprep.subr.mxu0 0.0
        %1075 = vmatpush1.xpose.msra.mxu0 0.0
        %1076 = vmatprep.subr.mxu0 0.0
        %1077 = vmatpush1.xpose.msra.mxu0 0.0
        %1078 = vmatprep.subr.mxu0 0.0
        %1079 = vmatpush1.xpose.msra.mxu0 0.0
        %1080 = vmatprep.subr.mxu0 0.0
        %1081 = vmatpush1.xpose.msra.mxu0 0.0
        %1082 = vmatprep.subr.mxu0 0.0
        %1083 = vmatpush1.xpose.msra.mxu0 0.0
        %1084 = vmatprep.subr.mxu0 0.0
        %1085 = vmatpush1.xpose.msra.mxu0 0.0
        %1086 = vmatprep.subr.mxu0 0.0
        %1087 = vmatpush1.xpose.msra.mxu0 0.0
        %1088 = vmatprep.subr.mxu0 0.0
        %1089 = vmatpush1.xpose.msra.mxu0 0.0
        %1090 = vmatprep.subr.mxu0 0.0
        %1091 = vmatpush1.xpose.msra.mxu0 0.0
        %1092 = vmatprep.subr.mxu0 0.0
        %1093 = vmatpush1.xpose.msra.mxu0 0.0
        %1094 = vmatprep.subr.mxu0 0.0
        %1095 = vmatpush1.xpose.msra.mxu0 0.0
        %1096 = vmatprep.subr.mxu0 0.0
        %1097 = vmatpush1.xpose.msra.mxu0 0.0
        %1098 = vmatprep.subr.mxu0 0.0
        %1099 = vmatpush1.xpose.msra.mxu0 0.0
        %1100 = vmatprep.subr.mxu0 0.0
        %1101 = vmatpush1.xpose.msra.mxu0 0.0
        %1102 = vmatprep.subr.mxu0 0.0
        %1103 = vmatpush1.xpose.msra.mxu0 0.0
        %1104 = vmatprep.subr.mxu0 0.0
        %1105 = vmatpush1.xpose.msra.mxu0 0.0
        %1106 = vmatprep.subr.mxu0 0.0
        %1107 = vmatpush1.xpose.msra.mxu0 0.0
        %1108 = vmatprep.subr.mxu0 0.0
        %1109 = vmatpush1.xpose.msra.mxu0 0.0
        %1110 = vmatprep.subr.mxu0 0.0
        %1111 = vmatpush1.xpose.msra.mxu0 0.0
        %1112 = vmatprep.subr.mxu0 0.0
        %1113 = vmatpush1.xpose.msra.mxu0 0.0
        %1114 = vmatprep.subr.mxu0 0.0
        %1115 = vmatpush1.xpose.msra.mxu0 0.0
        %1116 = vmatprep.subr.mxu0 0.0
        %1117 = vmatpush1.xpose.msra.mxu0 0.0
        %1118 = vmatprep.subr.mxu0 0.0
        %1119 = vmatpush1.xpose.msra.mxu0 0.0
        %1120 = vmatprep.subr.mxu0 0.0
        %1121 = vmatpush1.xpose.msra.mxu0 0.0
        %1122 = vmatprep.subr.mxu0 0.0
        %1123 = vmatpush1.xpose.msra.mxu0 0.0
        %1124 = vmatprep.subr.mxu0 0.0
        %1125 = vmatpush1.xpose.msra.mxu0 0.0
        %1126 = vmatprep.subr.mxu0 0.0
        %1127 = vmatpush1.xpose.msra.mxu0 0.0
        %1128 = vmatprep.subr.mxu0 0.0
        %1129 = vmatpush1.xpose.msra.mxu0 0.0
        %1130 = vmatprep.mubr.f32.mxu0 0.0
        %1131 = vmatmul.mubr.f32.gmra.mrb[0].mxu0 %v1062
        %v1132 = vpop.f32.mrb[0].mxu0
        %v1133 = vadd.f32 %v551, %v1132
        %v1134 = vpop.f32.mrb[0].mxu0
        %1135 = vdwg.mxu0
        %v1136 = vsel %vm629, %v1133, -inf
        %1137 = vmax.xlane.f32.xlu0 %v1136
        %v1138 = vpop.xlane.xlu0 %1137
        %v1139 = vsub.f32 %v1133, %v1138
        %v1140 = vmul.f32 %v1139, 1.442695
        %v1141 = vpow.pop %v1140
        %v1142 = vsel %vm629, %v1141, 0.0
        %1143 = vadd.xlane.f32.xlu0 %v1142
        %v1144 = vpop.xlane.xlu0 %1143
        %1145 = vrot.lane.b32.xlu0 %v542, 32
        %v1146 = vpop.permute.xlu0 %1145
        %v1149 = vsel %vm629, %v1141, 0
        %1151 = vmatprep.subr.mxu0 0.0
        %1152 = vmatpush1.msra.mxu0 %v1146
        %1153 = vmatprep.subr.mxu0 0.0
        %1154 = vmatpush1.msra.mxu0 0.0
        %1155 = vmatprep.subr.mxu0 0.0
        %1156 = vmatpush1.msra.mxu0 0.0
        %1157 = vmatprep.subr.mxu0 0.0
        %1158 = vmatpush1.msra.mxu0 0.0
        %1159 = vmatprep.subr.mxu0 0.0
        %1160 = vmatpush1.msra.mxu0 0.0
        %1161 = vmatprep.subr.mxu0 0.0
        %1162 = vmatpush1.msra.mxu0 0.0
        %1163 = vmatprep.subr.mxu0 0.0
        %1164 = vmatpush1.msra.mxu0 0.0
        %1165 = vmatprep.subr.mxu0 0.0
        %1166 = vmatpush1.msra.mxu0 0.0
        %1167 = vmatprep.subr.mxu0 0.0
        %1168 = vmatpush1.msra.mxu0 0.0
        %1169 = vmatprep.subr.mxu0 0.0
        %1170 = vmatpush1.msra.mxu0 0.0
        %1171 = vmatprep.subr.mxu0 0.0
        %1172 = vmatpush1.msra.mxu0 0.0
        %1173 = vmatprep.subr.mxu0 0.0
        %1174 = vmatpush1.msra.mxu0 0.0
        %1175 = vmatprep.subr.mxu0 0.0
        %1176 = vmatpush1.msra.mxu0 0.0
        %1177 = vmatprep.subr.mxu0 0.0
        %1178 = vmatpush1.msra.mxu0 0.0
        %1179 = vmatprep.subr.mxu0 0.0
        %1180 = vmatpush1.msra.mxu0 0.0
        %1181 = vmatprep.subr.mxu0 0.0
        %1182 = vmatpush1.msra.mxu0 0.0
        %1183 = vmatprep.subr.mxu0 0.0
        %1184 = vmatpush1.msra.mxu0 0.0
        %1185 = vmatprep.subr.mxu0 0.0
        %1186 = vmatpush1.msra.mxu0 0.0
        %1187 = vmatprep.subr.mxu0 0.0
        %1188 = vmatpush1.msra.mxu0 0.0
        %1189 = vmatprep.subr.mxu0 0.0
        %1190 = vmatpush1.msra.mxu0 0.0
        %1191 = vmatprep.subr.mxu0 0.0
        %1192 = vmatpush1.msra.mxu0 0.0
        %1193 = vmatprep.subr.mxu0 0.0
        %1194 = vmatpush1.msra.mxu0 0.0
        %1195 = vmatprep.subr.mxu0 0.0
        %1196 = vmatpush1.msra.mxu0 0.0
        %1197 = vmatprep.subr.mxu0 0.0
        %1198 = vmatpush1.msra.mxu0 0.0
        %1199 = vmatprep.subr.mxu0 0.0
        %1200 = vmatpush1.msra.mxu0 0.0
        %1201 = vmatprep.subr.mxu0 0.0
        %1202 = vmatpush1.msra.mxu0 0.0
        %1203 = vmatprep.subr.mxu0 0.0
        %1204 = vmatpush1.msra.mxu0 0.0
        %1205 = vmatprep.subr.mxu0 0.0
        %1206 = vmatpush1.msra.mxu0 0.0
        %1207 = vmatprep.subr.mxu0 0.0
        %1208 = vmatpush1.msra.mxu0 0.0
        %1209 = vmatprep.subr.mxu0 0.0
        %1210 = vmatpush1.msra.mxu0 0.0
        %1211 = vmatprep.subr.mxu0 0.0
        %1212 = vmatpush1.msra.mxu0 0.0
        %1213 = vmatprep.subr.mxu0 0.0
        %1214 = vmatpush1.msra.mxu0 0.0
        %1215 = vmatprep.mubr.f32.mxu0 0.0
        %1216 = vmatmul.mubr.f32.gmra.mrb[0].mxu0 %v1149
        %v1217 = vpop.f32.mrb[0].mxu0
        %v1218 = vadd.f32 0.0, %v1217
        %v1219 = vpop.f32.mrb[0].mxu0
        %1220 = vdwg.mxu0
        %v1221 = vrcp.pop %v1144
        %v1222 = vmul.f32 %v1218, %v1221
        %1224 = vrot.lane.b32.xlu0 %v1222, 96
        %v1225 = vpop.permute.xlu0 %1224
        %vm1227 = vcmask 1048320
        %1228 = vst.msk [vmem:[#allocation2] sm:$0xff] %vm1227, %v1225
        %v1229 = vld [vmem:[#allocation2] sm:$0xff]
        %v1230 = vld [vmem:[#allocation8] sm:$0xff]
        %v1231 = vld [vmem:[#allocation8 + $0x8] sm:$0xff]
        %v1232 = vld [vmem:[#allocation8 + $0x10] sm:$0xff]
        %v1233 = vld [vmem:[#allocation8 + $0x18] sm:$0xff]
        %v1234 = vld [vmem:[#allocation8 + $0x20] sm:$0xff]
        %v1235 = vld [vmem:[#allocation8 + $0x28] sm:$0xff]
        %v1236 = vld [vmem:[#allocation8 + $0x30] sm:$0xff]
        %v1237 = vld [vmem:[#allocation8 + $0x38] sm:$0xff]
        %v1238 = vld [vmem:[#allocation8 + $0x40] sm:$0xff]
        %v1239 = vld [vmem:[#allocation8 + $0x48] sm:$0xff]
        %v1240 = vld [vmem:[#allocation8 + $0x50] sm:$0xff]
        %v1241 = vld [vmem:[#allocation8 + $0x58] sm:$0xff]
        %v1242 = vld [vmem:[#allocation8 + $0x60] sm:$0xff]
        %v1243 = vld [vmem:[#allocation8 + $0x68] sm:$0xff]
        %v1244 = vld [vmem:[#allocation8 + $0x70] sm:$0xff]
        %v1245 = vld [vmem:[#allocation8 + $0x78] sm:$0xff]
        %v1246 = vld [vmem:[%s4] sm:$0x1]
        %v1248 = vlaneseq
        %v1249 = vshrl.u32 %v1248, 7
        %v1250 = vsub.s32 0, %v1249
        %v1251 = vrot.slane %v1246, %v1250
        %1253 = vmatprep.subr.mxu0 0.0
        %1254 = vmatpush1.msra.mxu0 %v1230
        %1255 = vmatprep.subr.mxu0 0.0
        %1256 = vmatpush1.msra.mxu0 %v1231
        %1257 = vmatprep.subr.mxu0 0.0
        %1258 = vmatpush1.msra.mxu0 %v1232
        %1259 = vmatprep.subr.mxu0 0.0
        %1260 = vmatpush1.msra.mxu0 %v1233
        %1261 = vmatprep.subr.mxu0 0.0
        %1262 = vmatpush1.msra.mxu0 %v1234
        %1263 = vmatprep.subr.mxu0 0.0
        %1264 = vmatpush1.msra.mxu0 %v1235
        %1265 = vmatprep.subr.mxu0 0.0
        %1266 = vmatpush1.msra.mxu0 %v1236
        %1267 = vmatprep.subr.mxu0 0.0
        %1268 = vmatpush1.msra.mxu0 %v1237
        %1269 = vmatprep.subr.mxu0 0.0
        %1270 = vmatpush1.msra.mxu0 %v1238
        %1271 = vmatprep.subr.mxu0 0.0
        %1272 = vmatpush1.msra.mxu0 %v1239
        %1273 = vmatprep.subr.mxu0 0.0
        %1274 = vmatpush1.msra.mxu0 %v1240
        %1275 = vmatprep.subr.mxu0 0.0
        %1276 = vmatpush1.msra.mxu0 %v1241
        %1277 = vmatprep.subr.mxu0 0.0
        %1278 = vmatpush1.msra.mxu0 %v1242
        %1279 = vmatprep.subr.mxu0 0.0
        %1280 = vmatpush1.msra.mxu0 %v1243
        %1281 = vmatprep.subr.mxu0 0.0
        %1282 = vmatpush1.msra.mxu0 %v1244
        %1283 = vmatprep.subr.mxu0 0.0
        %1284 = vmatpush1.msra.mxu0 %v1245
        %1285 = vmatprep.subr.mxu0 0.0
        %1286 = vmatpush1.msra.mxu0 0.0
        %1287 = vmatprep.subr.mxu0 0.0
        %1288 = vmatpush1.msra.mxu0 0.0
        %1289 = vmatprep.subr.mxu0 0.0
        %1290 = vmatpush1.msra.mxu0 0.0
        %1291 = vmatprep.subr.mxu0 0.0
        %1292 = vmatpush1.msra.mxu0 0.0
        %1293 = vmatprep.subr.mxu0 0.0
        %1294 = vmatpush1.msra.mxu0 0.0
        %1295 = vmatprep.subr.mxu0 0.0
        %1296 = vmatpush1.msra.mxu0 0.0
        %1297 = vmatprep.subr.mxu0 0.0
        %1298 = vmatpush1.msra.mxu0 0.0
        %1299 = vmatprep.subr.mxu0 0.0
        %1300 = vmatpush1.msra.mxu0 0.0
        %1301 = vmatprep.subr.mxu0 0.0
        %1302 = vmatpush1.msra.mxu0 0.0
        %1303 = vmatprep.subr.mxu0 0.0
        %1304 = vmatpush1.msra.mxu0 0.0
        %1305 = vmatprep.subr.mxu0 0.0
        %1306 = vmatpush1.msra.mxu0 0.0
        %1307 = vmatprep.subr.mxu0 0.0
        %1308 = vmatpush1.msra.mxu0 0.0
        %1309 = vmatprep.subr.mxu0 0.0
        %1310 = vmatpush1.msra.mxu0 0.0
        %1311 = vmatprep.subr.mxu0 0.0
        %1312 = vmatpush1.msra.mxu0 0.0
        %1313 = vmatprep.subr.mxu0 0.0
        %1314 = vmatpush1.msra.mxu0 0.0
        %1315 = vmatprep.subr.mxu0 0.0
        %1316 = vmatpush1.msra.mxu0 0.0
        %1317 = vmatprep.mubr.f32.mxu0 0.0
        %1318 = vmatmul.mubr.f32.gmra.mrb[0].mxu0 %v1229
        %v1319 = vpop.f32.mrb[0].mxu0
        %v1320 = vadd.f32 %v1251, %v1319
        %v1321 = vpop.f32.mrb[0].mxu0
        %1322 = vdwg.mxu0
        %v1323 = vld [vmem:[#allocation9] sm:$0xff]
        %v1324 = vld [vmem:[#allocation9 + $0x8] sm:$0xff]
        %v1325 = vld [vmem:[#allocation9 + $0x10] sm:$0xff]
        %v1326 = vld [vmem:[#allocation9 + $0x18] sm:$0xff]
        %v1327 = vld [vmem:[#allocation9 + $0x20] sm:$0xff]
        %v1328 = vld [vmem:[#allocation9 + $0x28] sm:$0xff]
        %v1329 = vld [vmem:[#allocation9 + $0x30] sm:$0xff]
        %v1330 = vld [vmem:[#allocation9 + $0x38] sm:$0xff]
        %v1331 = vld [vmem:[#allocation9 + $0x40] sm:$0xff]
        %v1332 = vld [vmem:[#allocation9 + $0x48] sm:$0xff]
        %v1333 = vld [vmem:[#allocation9 + $0x50] sm:$0xff]
        %v1334 = vld [vmem:[#allocation9 + $0x58] sm:$0xff]
        %v1335 = vld [vmem:[#allocation9 + $0x60] sm:$0xff]
        %v1336 = vld [vmem:[#allocation9 + $0x68] sm:$0xff]
        %v1337 = vld [vmem:[#allocation9 + $0x70] sm:$0xff]
        %v1338 = vld [vmem:[#allocation9 + $0x78] sm:$0xff]
        %v1339 = vld [vmem:[%s6] sm:$0x1]
        %v1341 = vlaneseq
        %v1342 = vshrl.u32 %v1341, 7
        %v1343 = vsub.s32 0, %v1342
        %v1344 = vrot.slane %v1339, %v1343
        %1346 = vmatprep.subr.mxu0 0.0
        %1347 = vmatpush1.msra.mxu0 %v1323
        %1348 = vmatprep.subr.mxu0 0.0
        %1349 = vmatpush1.msra.mxu0 %v1324
        %1350 = vmatprep.subr.mxu0 0.0
        %1351 = vmatpush1.msra.mxu0 %v1325
        %1352 = vmatprep.subr.mxu0 0.0
        %1353 = vmatpush1.msra.mxu0 %v1326
        %1354 = vmatprep.subr.mxu0 0.0
        %1355 = vmatpush1.msra.mxu0 %v1327
        %1356 = vmatprep.subr.mxu0 0.0
        %1357 = vmatpush1.msra.mxu0 %v1328
        %1358 = vmatprep.subr.mxu0 0.0
        %1359 = vmatpush1.msra.mxu0 %v1329
        %1360 = vmatprep.subr.mxu0 0.0
        %1361 = vmatpush1.msra.mxu0 %v1330
        %1362 = vmatprep.subr.mxu0 0.0
        %1363 = vmatpush1.msra.mxu0 %v1331
        %1364 = vmatprep.subr.mxu0 0.0
        %1365 = vmatpush1.msra.mxu0 %v1332
        %1366 = vmatprep.subr.mxu0 0.0
        %1367 = vmatpush1.msra.mxu0 %v1333
        %1368 = vmatprep.subr.mxu0 0.0
        %1369 = vmatpush1.msra.mxu0 %v1334
        %1370 = vmatprep.subr.mxu0 0.0
        %1371 = vmatpush1.msra.mxu0 %v1335
        %1372 = vmatprep.subr.mxu0 0.0
        %1373 = vmatpush1.msra.mxu0 %v1336
        %1374 = vmatprep.subr.mxu0 0.0
        %1375 = vmatpush1.msra.mxu0 %v1337
        %1376 = vmatprep.subr.mxu0 0.0
        %1377 = vmatpush1.msra.mxu0 %v1338
        %1378 = vmatprep.subr.mxu0 0.0
        %1379 = vmatpush1.msra.mxu0 0.0
        %1380 = vmatprep.subr.mxu0 0.0
        %1381 = vmatpush1.msra.mxu0 0.0
        %1382 = vmatprep.subr.mxu0 0.0
        %1383 = vmatpush1.msra.mxu0 0.0
        %1384 = vmatprep.subr.mxu0 0.0
        %1385 = vmatpush1.msra.mxu0 0.0
        %1386 = vmatprep.subr.mxu0 0.0
        %1387 = vmatpush1.msra.mxu0 0.0
        %1388 = vmatprep.subr.mxu0 0.0
        %1389 = vmatpush1.msra.mxu0 0.0
        %1390 = vmatprep.subr.mxu0 0.0
        %1391 = vmatpush1.msra.mxu0 0.0
        %1392 = vmatprep.subr.mxu0 0.0
        %1393 = vmatpush1.msra.mxu0 0.0
        %1394 = vmatprep.subr.mxu0 0.0
        %1395 = vmatpush1.msra.mxu0 0.0
        %1396 = vmatprep.subr.mxu0 0.0
        %1397 = vmatpush1.msra.mxu0 0.0
        %1398 = vmatprep.subr.mxu0 0.0
        %1399 = vmatpush1.msra.mxu0 0.0
        %1400 = vmatprep.subr.mxu0 0.0
        %1401 = vmatpush1.msra.mxu0 0.0
        %1402 = vmatprep.subr.mxu0 0.0
        %1403 = vmatpush1.msra.mxu0 0.0
        %1404 = vmatprep.subr.mxu0 0.0
        %1405 = vmatpush1.msra.mxu0 0.0
        %1406 = vmatprep.subr.mxu0 0.0
        %1407 = vmatpush1.msra.mxu0 0.0
        %1408 = vmatprep.subr.mxu0 0.0
        %1409 = vmatpush1.msra.mxu0 0.0
        %1410 = vmatprep.mubr.f32.mxu0 0.0
        %1411 = vmatmul.mubr.f32.gmra.mrb[0].mxu0 %v1320
        %v1412 = vpop.f32.mrb[0].mxu0
        %v1413 = vadd.f32 %v1344, %v1412
        %v1414 = vpop.f32.mrb[0].mxu0
        %1415 = vdwg.mxu0
        %1416 = vst [vmem:[%s337] sm:$0xff] %v1413
        %s1417 = sand.u32 %s186, 1
        %s1418 = scalar_lea.sflag [#allocation5], %s1417
        %s1419 = sand.u32 %s186, 1
        %s1420 = smul.addr %s1419, 8
        %s1421 = scalar_lea.vmem [#allocation11], %s1420
        // Predicated region
        $region65: #{tpu_custom_call.1} parent=47 // pred_check
          %p1422 = pneg %p196
        $region66: #{tpu_custom_call.1} parent=47 // pred_check_branch
          %1424 = sbr.rel (%p1422) target = $region68
        $region67: #{tpu_custom_call.1} parent=47 // pred_region
          %s1426 = ssub.s32 128, 128
          %1427 = vsyncadd %s1418, %s1426
          %s1428 = smul.addr %s26, 128
          %s1429 = scalar_lea.hbm %s7, %s1428
          %s1431 = sshll.u32 %s1421, 4
          %s1432 = int_to_ptr.vmem [resolvable:$true] %s1431
          %1434 = dma.vmem_to_hbm [thread:$0]  %s1432, 128, %s1429, %s1418
        $region68: #{tpu_custom_call.1} parent=47 // pred_fallthru
          _
      $region48: #{tpu_custom_call.1} parent=5 // pred_fallthru
        _
      %p1435 = scmp.le.s32.totalorder 2, %s21
      // Predicated region
      $region69: #{tpu_custom_call.1} parent=5 // pred_check
        %p1436 = pneg %p1435
      $region70: #{tpu_custom_call.1} parent=5 // pred_check_branch
        %1438 = sbr.rel (%p1436) target = $region72
      $region71: #{tpu_custom_call.1} parent=5 // pred_region
        %s1439 = ssub.s32 %s21, 2
        // Predicated region
        $region73: #{tpu_custom_call.1} parent=71 // pred_check
          %p1440 = pneg %p202
        $region74: #{tpu_custom_call.1} parent=71 // pred_check_branch
          %1442 = sbr.rel (%p1440) target = $region76
        $region75: #{tpu_custom_call.1} parent=71 // pred_region
          %s1443 = sand.u32 %s187, 1
          %s1444 = scalar_lea.sflag [#allocation5], %s1443
          %s1445 = sand.u32 %s187, 1
          %s1446 = smul.addr %s1445, 8
          %s1447 = scalar_lea.vmem [#allocation11], %s1446
          %1448 = dma.done %s1444, 128
        $region76: #{tpu_custom_call.1} parent=71 // pred_fallthru
          _
      $region72: #{tpu_custom_call.1} parent=5 // pred_fallthru
        _
    $region6: #{tpu_custom_call.1} parent=1 // loop_footer
      %s25 = sadd.s32 1, %s21
    $region7: #{tpu_custom_call.1} parent=1 // loop_footer_branch
      %20 = sbr.rel target = $region3
    $region8: #{tpu_custom_call.1} parent=1 // loop_exit
      _
    %1449 = vsyncpa [#allocation4], 1
    %s1450 = scalar_lea.sflag [#allocation4], 1
    %1451 = vsyncpa %s1450, 1
    %1452 = vsyncpa [#allocation7], 1
    %1453 = vsyncpa [#allocation10], 1
    %1454 = vsyncpa [#allocation5], 1
    %s1455 = scalar_lea.sflag [#allocation5], 1
    %1456 = vsyncpa %s1455, 1

</llo_original>
